<compile_context>
chip_gen: v7x
topology: tpu7x:2x2x1
jax: 0.10.0
libtpu: 0.0.40
codegen_flags: <defaults>
</compile_context>

<pallas_src>
import math

import jax
import jax.numpy as jnp
import numpy as np
from jax import lax
from jax.experimental import pallas as pl
from jax.experimental.pallas import tpu as pltpu

# ----- problem sizes (small, consistent with the module's constructor) -----
HID = 32          # hid_dim
N_HEADS = 4       # n_heads
HEAD_DIM = HID // N_HEADS
PF = 64           # pf_dim
B = 2             # batch
T = 8             # target sequence length
S = 8             # source (encoder) sequence length
EPS = 1e-5        # nn.LayerNorm default eps
NEG = -1e10       # additive mask bias (same value the reference uses)


# ---------------------------------------------------------------------------
# in-kernel helper
# ---------------------------------------------------------------------------
def _layernorm(x, g, b):
    mean = jnp.mean(x, axis=-1, keepdims=True)
    var = jnp.mean((x - mean) ** 2, axis=-1, keepdims=True)
    return (x - mean) * jax.lax.rsqrt(var + EPS) * g + b


# ---------------------------------------------------------------------------
# Pallas kernel: full decoder layer, whole batch, single invocation (no grid)
# ---------------------------------------------------------------------------
def decoder_layer_kernel(dyn_ref, w_ref, p_ref, out_ref):
    H = HID
    BT = B * T
    BS = B * S

    # ---- dynamic slab: [trg (H) | enc (H) | self bias (BT) | cross bias (BS)] ----
    trg = dyn_ref[:, 0:H]                                   # (B*T, H)
    enc = dyn_ref[:, H:2 * H]                               # (B*S, H)
    bias_self = dyn_ref[:, 2 * H:2 * H + BT]                # (B*T, B*T) block-diag mask bias
    bias_cross = dyn_ref[:, 2 * H + BT:2 * H + BT + BS]     # (B*T, B*S)

    # ---- weight slab (32, 320): static lane slices ----
    w_qkv_s = w_ref[:, 0:3 * H]            # (H, 3H)  self QKV (Q cols pre-scaled by 1/sqrt(d))
    w_o_s = w_ref[:, 3 * H:4 * H]          # (H, H)
    w_q_c = w_ref[:, 4 * H:5 * H]          # (H, H)   cross Q (pre-scaled)
    w_kv_c = w_ref[:, 5 * H:7 * H]         # (H, 2H)  cross KV
    w_o_c = w_ref[:, 7 * H:8 * H]          # (H, H)
    ff_w1 = w_ref[:, 8 * H:8 * H + PF]     # (H, PF)

    # ---- small-parameter slab (70, 96): static slices, no relayout ----
    b_qkv_s = p_ref[0:1, :]                # (1, 3H)
    b_qkv_c = p_ref[1:2, :]                # (1, 3H)
    sa_bo = p_ref[2:3, 0:H]
    ca_bo = p_ref[2:3, H:2 * H]
    ff_b2 = p_ref[2:3, 2 * H:3 * H]
    ln1_g = p_ref[3:4, 0:H]
    ln1_b = p_ref[3:4, H:2 * H]
    ln2_g = p_ref[3:4, 2 * H:3 * H]
    ln2_b = p_ref[4:5, 0:H]
    ln3_g = p_ref[4:5, H:2 * H]
    ln3_b = p_ref[4:5, 2 * H:3 * H]
    ff_b1 = p_ref[5:6, 0:PF]               # (1, PF)
    ff_w2 = p_ref[6:6 + PF, 0:H]           # (PF, H)

    dn = (((1,), (1,)), ((), ()))          # contract last dims: q @ k^T without explicit .T

    def attention(q, k, v, bias, w_o, b_o, kv_blk, want_attn):
        """q: (B*Tq, H) pre-scaled; k, v: (B*Skv, H); bias: (B*Tq, B*Skv) block-diagonal."""
        # all head score matmuls back-to-back (independent MXU pushes)
        scores = []
        for h in range(N_HEADS):
            sl = slice(h * HEAD_DIM, (h + 1) * HEAD_DIM)
            e = lax.dot_general(q[:, sl], k[:, sl], dn,
                                preferred_element_type=jnp.float32)
            scores.append(e + bias)
        # softmax per head (VPU/EUP; cross-batch entries underflow to exactly 0)
        probs = []
        for e in scores:
            m = jnp.max(e, axis=-1, keepdims=True)
            p = jnp.exp(e - m)
            inv = pl.reciprocal(jnp.sum(p, axis=-1, keepdims=True), approx=True)
            probs.append(p * inv)
        # PV matmuls back-to-back
        ctx_heads = []
        for h in range(N_HEADS):
            sl = slice(h * HEAD_DIM, (h + 1) * HEAD_DIM)
            ctx_heads.append(jnp.dot(probs[h], v[:, sl],
                                     preferred_element_type=jnp.float32))
        ctx = jnp.concatenate(ctx_heads, axis=-1)                       # (B*Tq, H)
        out = jnp.dot(ctx, w_o, preferred_element_type=jnp.float32) + b_o
        attn = None
        if want_attn:
            heads = []
            for h in range(N_HEADS):
                # off-block probabilities are exactly 0 -> summing the column blocks
                # recovers the per-batch (Tq, Skv) attention rows.
                a = probs[h][:, 0:kv_blk]
                for bb in range(1, B):
                    a = a + probs[h][:, bb * kv_blk:(bb + 1) * kv_blk]
                heads.append(a)
            attn = jnp.concatenate(heads, axis=-1)                      # (B*Tq, N_HEADS*Skv)
        return out, attn

    # ---------------- self attention + residual + LayerNorm ----------------
    qkv = jnp.dot(trg, w_qkv_s, preferred_element_type=jnp.float32) + b_qkv_s   # (B*T, 3H)
    q = qkv[:, 0:H]
    k = qkv[:, H:2 * H]
    v = qkv[:, 2 * H:3 * H]
    sa_out, _ = attention(q, k, v, bias_self, w_o_s, sa_bo, T, False)
    x = _layernorm(trg + sa_out, ln1_g, ln1_b)

    # ------------- encoder (cross) attention + residual + LayerNorm --------
    qc = jnp.dot(x, w_q_c, preferred_element_type=jnp.float32) + b_qkv_c[:, 0:H]      # (B*T, H)
    kv = jnp.dot(enc, w_kv_c, preferred_element_type=jnp.float32) + b_qkv_c[:, H:3 * H]  # (B*S, 2H)
    kc = kv[:, 0:H]
    vc = kv[:, H:2 * H]
    ca_out, attn_c = attention(qc, kc, vc, bias_cross, w_o_c, ca_bo, S, True)
    # write the attention map immediately (frees it before the FFN, store overlaps compute)
    out_ref[:, H:H + N_HEADS * S] = attn_c
    x = _layernorm(x + ca_out, ln2_g, ln2_b)

    # -------------- positionwise feedforward + residual + LayerNorm --------
    h1 = jnp.maximum(
        jnp.dot(x, ff_w1, preferred_element_type=jnp.float32) + ff_b1, 0.0)       # (B*T, PF)
    ff = jnp.dot(h1, ff_w2, preferred_element_type=jnp.float32) + ff_b2
    x = _layernorm(x + ff, ln3_g, ln3_b)

    out_ref[:, 0:H] = x


# ---------------------------------------------------------------------------
# one-time parameter packing (init-time, NOT per forward call)
# ---------------------------------------------------------------------------
def pack_params(params):
    (sa_wq, sa_bq, sa_wk, sa_bk, sa_wv, sa_bv, sa_wo, sa_bo,
     ca_wq, ca_bq, ca_wk, ca_bk, ca_wv, ca_bv, ca_wo, ca_bo,
     ln1_g, ln1_b, ln2_g, ln2_b, ln3_g, ln3_b,
     ff_w1, ff_b1, ff_w2, ff_b2) = params

    inv = jnp.float32(1.0 / math.sqrt(HEAD_DIM))   # fold 1/sqrt(d) into Q weights/biases

    w_slab = jnp.concatenate(
        [sa_wq * inv, sa_wk, sa_wv,    # lanes   0: 96  self QKV
         sa_wo,                        # lanes  96:128
         ca_wq * inv,                  # lanes 128:160  cross Q
         ca_wk, ca_wv,                 # lanes 160:224  cross KV
         ca_wo,                        # lanes 224:256
         ff_w1], axis=1)               # lanes 256:320
    w_slab = w_slab.astype(jnp.float32)

    z32 = jnp.zeros((1, HID), jnp.float32)
    p_slab = jnp.concatenate([
        jnp.concatenate([sa_bq * inv, sa_bk, sa_bv], axis=1),          # row 0
        jnp.concatenate([ca_bq * inv, ca_bk, ca_bv], axis=1),          # row 1
        jnp.concatenate([sa_bo, ca_bo, ff_b2], axis=1),                # row 2
        jnp.concatenate([ln1_g, ln1_b, ln2_g], axis=1),                # row 3
        jnp.concatenate([ln2_b, ln3_g, ln3_b], axis=1),                # row 4
        jnp.concatenate([ff_b1, z32], axis=1),                         # row 5
        jnp.concatenate([ff_w2, jnp.zeros((PF, 2 * HID), jnp.float32)], axis=1),  # rows 6:70
    ], axis=0).astype(jnp.float32)                                     # (70, 96)

    return w_slab, p_slab


# ---------------------------------------------------------------------------
# per-call wrapper: mask bias, pallas_call, output split
# ---------------------------------------------------------------------------
def _block_diag_bias(per_batch):
    """per_batch: (B, R, C) additive bias per batch; off-block entries get NEG."""
    Bn, R, C = per_batch.shape
    on = jnp.eye(Bn, dtype=jnp.float32)[:, None, :, None]              # (B,1,B,1)
    full = per_batch[:, :, None, :] * on + jnp.float32(NEG) * (1.0 - on)
    return full.reshape(Bn * R, Bn * C)


def decoder_layer(trg, enc_src, trg_mask, src_mask, w_slab, p_slab):
    B_, T_, H_ = trg.shape
    S_ = enc_src.shape[1]
    # NOTE: the single dynamic slab assumes B*T == B*S (true here: T == S == 8).

    trg2 = trg.reshape(B_ * T_, H_)
    enc2 = enc_src.reshape(B_ * S_, H_)

    tb = jnp.where(trg_mask.reshape(B_, T_, T_) == 0,
                   jnp.float32(NEG), jnp.float32(0.0))                 # (B, T, T)
    sb = jnp.where(src_mask.reshape(B_, 1, S_) == 0,
                   jnp.float32(NEG), jnp.float32(0.0))                 # (B, 1, S)
    bias_self = _block_diag_bias(tb)                                   # (B*T, B*T)
    bias_cross = _block_diag_bias(jnp.broadcast_to(sb, (B_, T_, S_)))  # (B*T, B*S)

    dyn = jnp.concatenate([trg2, enc2, bias_self, bias_cross], axis=1)  # (B*T, 2H+BT+BS)

    vmem = pl.BlockSpec(memory_space=pltpu.MemorySpace.VMEM)
    combined = pl.pallas_call(
        decoder_layer_kernel,
        out_shape=jax.ShapeDtypeStruct((B_ * T_, H_ + N_HEADS * S_), jnp.float32),
        in_specs=[vmem, vmem, vmem],
        out_specs=vmem,
    )(dyn, w_slab, p_slab)

    out = combined[:, 0:H_].reshape(B_, T_, H_)
    attn = combined[:, H_:].reshape(B_, T_, N_HEADS, S_).transpose(0, 2, 1, 3)
    return out, attn


decoder_layer = jax.jit(decoder_layer)


# ---------------------------------------------------------------------------
# pure-JAX reference (mirrors the PyTorch forward, eval mode)
# ---------------------------------------------------------------------------
def decoder_layer_ref(trg, enc_src, trg_mask, src_mask, params):
    (sa_wq, sa_bq, sa_wk, sa_bk, sa_wv, sa_bv, sa_wo, sa_bo,
     ca_wq, ca_bq, ca_wk, ca_bk, ca_wv, ca_bv, ca_wo, ca_bo,
     ln1_g, ln1_b, ln2_g, ln2_b, ln3_g, ln3_b,
     ff_w1, ff_b1, ff_w2, ff_b2) = params

    def mha(xq, xkv, mask, wq, bq, wk, bk, wv, bv, wo, bo):
        Bn, Tq, H = xq.shape
        Sn = xkv.shape[1]
        Q = xq @ wq + bq
        K = xkv @ wk + bk
        V = xkv @ wv + bv
        Qh = Q.reshape(Bn, Tq, N_HEADS, HEAD_DIM).transpose(0, 2, 1, 3)
        Kh = K.reshape(Bn, Sn, N_HEADS, HEAD_DIM).transpose(0, 2, 1, 3)
        Vh = V.reshape(Bn, Sn, N_HEADS, HEAD_DIM).transpose(0, 2, 1, 3)
        e = jnp.einsum('bhtd,bhsd->bhts', Qh, Kh) / jnp.float32(math.sqrt(HEAD_DIM))
        e = jnp.where(mask == 0, jnp.float32(NEG), e)
        a = jax.nn.softmax(e, axis=-1)
        x = jnp.einsum('bhts,bhsd->bhtd', a, Vh)
        x = x.transpose(0, 2, 1, 3).reshape(Bn, Tq, H)
        return x @ wo + bo, a

    def ln(x, g, b):
        m = jnp.mean(x, axis=-1, keepdims=True)
        v = jnp.mean((x - m) ** 2, axis=-1, keepdims=True)
        return (x - m) * jax.lax.rsqrt(v + EPS) * g + b

    _t, _ = mha(trg, trg, trg_mask, sa_wq, sa_bq, sa_wk, sa_bk, sa_wv, sa_bv, sa_wo, sa_bo)
    t = ln(trg + _t, ln1_g, ln1_b)
    _t, attn = mha(t, enc_src, src_mask, ca_wq, ca_bq, ca_wk, ca_bk, ca_wv, ca_bv, ca_wo, ca_bo)
    t = ln(t + _t, ln2_g, ln2_b)
    _t = jnp.maximum(t @ ff_w1 + ff_b1, 0.0) @ ff_w2 + ff_b2
    t = ln(t + _t, ln3_g, ln3_b)
    return t, attn


# ---------------------------------------------------------------------------
# deterministic parameter init + example run
# ---------------------------------------------------------------------------
def init_params(key):
    ks = jax.random.split(key, 12)

    def lin(k, fan_in, fan_out):
        w = jax.random.normal(k, (fan_in, fan_out), jnp.float32) * 0.05
        b = jnp.zeros((1, fan_out), jnp.float32)
        return w, b

    sa_wq, sa_bq = lin(ks[0], HID, HID)
    sa_wk, sa_bk = lin(ks[1], HID, HID)
    sa_wv, sa_bv = lin(ks[2], HID, HID)
    sa_wo, sa_bo = lin(ks[3], HID, HID)
    ca_wq, ca_bq = lin(ks[4], HID, HID)
    ca_wk, ca_bk = lin(ks[5], HID, HID)
    ca_wv, ca_bv = lin(ks[6], HID, HID)
    ca_wo, ca_bo = lin(ks[7], HID, HID)
    ln1_g = jnp.ones((1, HID), jnp.float32); ln1_b = jnp.zeros((1, HID), jnp.float32)
    ln2_g = jnp.ones((1, HID), jnp.float32); ln2_b = jnp.zeros((1, HID), jnp.float32)
    ln3_g = jnp.ones((1, HID), jnp.float32); ln3_b = jnp.zeros((1, HID), jnp.float32)
    ff_w1, ff_b1 = lin(ks[8], HID, PF)
    ff_w2, ff_b2 = lin(ks[9], PF, HID)

    return (sa_wq, sa_bq, sa_wk, sa_bk, sa_wv, sa_bv, sa_wo, sa_bo,
            ca_wq, ca_bq, ca_wk, ca_bk, ca_wv, ca_bv, ca_wo, ca_bo,
            ln1_g, ln1_b, ln2_g, ln2_b, ln3_g, ln3_b,
            ff_w1, ff_b1, ff_w2, ff_b2)


if __name__ == "__main__":
    key = jax.random.PRNGKey(0)
    k_trg, k_enc, k_par = jax.random.split(key, 3)

    trg = jax.random.normal(k_trg, (B, T, HID), jnp.float32)
    enc_src = jax.random.normal(k_enc, (B, S, HID), jnp.float32)

    # causal target mask (B, 1, T, T); source padding mask (B, 1, 1, S)
    trg_mask = jnp.broadcast_to(jnp.tril(jnp.ones((T, T), jnp.float32)),
                                (B, 1, T, T)).astype(jnp.float32)
    src_mask = jnp.ones((B, 1, 1, S), jnp.float32)
    src_mask = src_mask.at[1, 0, 0, S - 2:].set(0.0)   # mask last 2 src tokens of batch 1

    params = init_params(k_par)
    w_slab, p_slab = pack_params(params)               # packed once at init, reused per call

    out, attention = decoder_layer(trg, enc_src, trg_mask, src_mask, w_slab, p_slab)
    out = jax.block_until_ready(out)
    attention = jax.block_until_ready(attention)

    ref_out, ref_attn = decoder_layer_ref(trg, enc_src, trg_mask, src_mask, params)
    np.testing.assert_allclose(np.asarray(out), np.asarray(ref_out), rtol=2e-3, atol=2e-3)
    np.testing.assert_allclose(np.asarray(attention), np.asarray(ref_attn), rtol=2e-3, atol=2e-3)

    # TODO(synk): dropout is treated as identity (inference / eval mode); no RNG dropout in-kernel.
    print("KERNEL_OK")
</pallas_src>

<mosaic_0001>
module attributes {stable_mosaic.version = 11 : i64} {
  func.func @decoder_layer_kernel(%arg0: memref<16x96xf32, #tpu.memory_space<vmem>>, %arg1: memref<32x320xf32, #tpu.memory_space<vmem>>, %arg2: memref<70x96xf32, #tpu.memory_space<vmem>>, %arg3: memref<16x64xf32, #tpu.memory_space<vmem>>) attributes {dimension_semantics = [], scalar_prefetch = 0 : i64, scratch_operands = 0 : i64, tpu.core_type = #tpu.core_type<tc>} {
    %c0 = arith.constant 0 : index
    %c0_0 = arith.constant 0 : index
    %0 = vector.load %arg0[%c0, %c0_0] : memref<16x96xf32, #tpu.memory_space<vmem>>, vector<16x32xf32>
    %c0_1 = arith.constant 0 : index
    %c32 = arith.constant 32 : index
    %1 = vector.load %arg0[%c0_1, %c32] : memref<16x96xf32, #tpu.memory_space<vmem>>, vector<16x32xf32>
    %c0_2 = arith.constant 0 : index
    %c64 = arith.constant 64 : index
    %2 = vector.load %arg0[%c0_2, %c64] : memref<16x96xf32, #tpu.memory_space<vmem>>, vector<16x16xf32>
    %c0_3 = arith.constant 0 : index
    %c80 = arith.constant 80 : index
    %3 = vector.load %arg0[%c0_3, %c80] : memref<16x96xf32, #tpu.memory_space<vmem>>, vector<16x16xf32>
    %c0_4 = arith.constant 0 : index
    %c0_5 = arith.constant 0 : index
    %4 = vector.load %arg1[%c0_4, %c0_5] : memref<32x320xf32, #tpu.memory_space<vmem>>, vector<32x96xf32>
    %c0_6 = arith.constant 0 : index
    %c96 = arith.constant 96 : index
    %5 = vector.load %arg1[%c0_6, %c96] : memref<32x320xf32, #tpu.memory_space<vmem>>, vector<32x32xf32>
    %c0_7 = arith.constant 0 : index
    %c128 = arith.constant 128 : index
    %6 = vector.load %arg1[%c0_7, %c128] : memref<32x320xf32, #tpu.memory_space<vmem>>, vector<32x32xf32>
    %c0_8 = arith.constant 0 : index
    %c160 = arith.constant 160 : index
    %7 = vector.load %arg1[%c0_8, %c160] : memref<32x320xf32, #tpu.memory_space<vmem>>, vector<32x64xf32>
    %c0_9 = arith.constant 0 : index
    %c224 = arith.constant 224 : index
    %8 = vector.load %arg1[%c0_9, %c224] : memref<32x320xf32, #tpu.memory_space<vmem>>, vector<32x32xf32>
    %c0_10 = arith.constant 0 : index
    %c256 = arith.constant 256 : index
    %9 = vector.load %arg1[%c0_10, %c256] : memref<32x320xf32, #tpu.memory_space<vmem>>, vector<32x64xf32>
    %c0_11 = arith.constant 0 : index
    %c0_12 = arith.constant 0 : index
    %10 = vector.load %arg2[%c0_11, %c0_12] : memref<70x96xf32, #tpu.memory_space<vmem>>, vector<1x96xf32>
    %c1 = arith.constant 1 : index
    %c0_13 = arith.constant 0 : index
    %11 = vector.load %arg2[%c1, %c0_13] : memref<70x96xf32, #tpu.memory_space<vmem>>, vector<1x96xf32>
    %c2 = arith.constant 2 : index
    %c0_14 = arith.constant 0 : index
    %12 = vector.load %arg2[%c2, %c0_14] : memref<70x96xf32, #tpu.memory_space<vmem>>, vector<1x32xf32>
    %c2_15 = arith.constant 2 : index
    %c32_16 = arith.constant 32 : index
    %13 = vector.load %arg2[%c2_15, %c32_16] : memref<70x96xf32, #tpu.memory_space<vmem>>, vector<1x32xf32>
    %c2_17 = arith.constant 2 : index
    %c64_18 = arith.constant 64 : index
    %14 = vector.load %arg2[%c2_17, %c64_18] : memref<70x96xf32, #tpu.memory_space<vmem>>, vector<1x32xf32>
    %c3 = arith.constant 3 : index
    %c0_19 = arith.constant 0 : index
    %15 = vector.load %arg2[%c3, %c0_19] : memref<70x96xf32, #tpu.memory_space<vmem>>, vector<1x32xf32>
    %c3_20 = arith.constant 3 : index
    %c32_21 = arith.constant 32 : index
    %16 = vector.load %arg2[%c3_20, %c32_21] : memref<70x96xf32, #tpu.memory_space<vmem>>, vector<1x32xf32>
    %c3_22 = arith.constant 3 : index
    %c64_23 = arith.constant 64 : index
    %17 = vector.load %arg2[%c3_22, %c64_23] : memref<70x96xf32, #tpu.memory_space<vmem>>, vector<1x32xf32>
    %c4 = arith.constant 4 : index
    %c0_24 = arith.constant 0 : index
    %18 = vector.load %arg2[%c4, %c0_24] : memref<70x96xf32, #tpu.memory_space<vmem>>, vector<1x32xf32>
    %c4_25 = arith.constant 4 : index
    %c32_26 = arith.constant 32 : index
    %19 = vector.load %arg2[%c4_25, %c32_26] : memref<70x96xf32, #tpu.memory_space<vmem>>, vector<1x32xf32>
    %c4_27 = arith.constant 4 : index
    %c64_28 = arith.constant 64 : index
    %20 = vector.load %arg2[%c4_27, %c64_28] : memref<70x96xf32, #tpu.memory_space<vmem>>, vector<1x32xf32>
    %c5 = arith.constant 5 : index
    %c0_29 = arith.constant 0 : index
    %21 = vector.load %arg2[%c5, %c0_29] : memref<70x96xf32, #tpu.memory_space<vmem>>, vector<1x64xf32>
    %c6 = arith.constant 6 : index
    %c0_30 = arith.constant 0 : index
    %22 = vector.load %arg2[%c6, %c0_30] : memref<70x96xf32, #tpu.memory_space<vmem>>, vector<64x32xf32>
    %cst = arith.constant dense<0.000000e+00> : vector<16x96xf32>
    %23 = tpu.matmul %0, %4, %cst {dimension_numbers = #tpu.dot_dimension_numbers<[1], [0], [0], [1], [0, 0, 1, 1], [], []>} : vector<16x32xf32>, vector<32x96xf32>, vector<16x96xf32> -> vector<16x96xf32>
    %24 = vector.broadcast %10 : vector<1x96xf32> to vector<16x96xf32>
    %25 = arith.addf %23, %24 : vector<16x96xf32>
    %26 = vector.extract_strided_slice %25 {offsets = [0, 0], sizes = [16, 32], strides = [1, 1]} : vector<16x96xf32> to vector<16x32xf32>
    %27 = vector.extract_strided_slice %25 {offsets = [0, 32], sizes = [16, 32], strides = [1, 1]} : vector<16x96xf32> to vector<16x32xf32>
    %28 = vector.extract_strided_slice %25 {offsets = [0, 64], sizes = [16, 32], strides = [1, 1]} : vector<16x96xf32> to vector<16x32xf32>
    %29 = vector.extract_strided_slice %26 {offsets = [0, 0], sizes = [16, 8], strides = [1, 1]} : vector<16x32xf32> to vector<16x8xf32>
    %30 = vector.extract_strided_slice %27 {offsets = [0, 0], sizes = [16, 8], strides = [1, 1]} : vector<16x32xf32> to vector<16x8xf32>
    %cst_31 = arith.constant dense<0.000000e+00> : vector<16x16xf32>
    %31 = tpu.matmul %29, %30, %cst_31 {dimension_numbers = #tpu.dot_dimension_numbers<[1], [1], [0], [0], [0, 0, 1, 0], [], []>} : vector<16x8xf32>, vector<16x8xf32>, vector<16x16xf32> -> vector<16x16xf32>
    %32 = arith.addf %31, %2 : vector<16x16xf32>
    %33 = vector.extract_strided_slice %26 {offsets = [0, 8], sizes = [16, 8], strides = [1, 1]} : vector<16x32xf32> to vector<16x8xf32>
    %34 = vector.extract_strided_slice %27 {offsets = [0, 8], sizes = [16, 8], strides = [1, 1]} : vector<16x32xf32> to vector<16x8xf32>
    %cst_32 = arith.constant dense<0.000000e+00> : vector<16x16xf32>
    %35 = tpu.matmul %33, %34, %cst_32 {dimension_numbers = #tpu.dot_dimension_numbers<[1], [1], [0], [0], [0, 0, 1, 0], [], []>} : vector<16x8xf32>, vector<16x8xf32>, vector<16x16xf32> -> vector<16x16xf32>
    %36 = arith.addf %35, %2 : vector<16x16xf32>
    %37 = vector.extract_strided_slice %26 {offsets = [0, 16], sizes = [16, 8], strides = [1, 1]} : vector<16x32xf32> to vector<16x8xf32>
    %38 = vector.extract_strided_slice %27 {offsets = [0, 16], sizes = [16, 8], strides = [1, 1]} : vector<16x32xf32> to vector<16x8xf32>
    %cst_33 = arith.constant dense<0.000000e+00> : vector<16x16xf32>
    %39 = tpu.matmul %37, %38, %cst_33 {dimension_numbers = #tpu.dot_dimension_numbers<[1], [1], [0], [0], [0, 0, 1, 0], [], []>} : vector<16x8xf32>, vector<16x8xf32>, vector<16x16xf32> -> vector<16x16xf32>
    %40 = arith.addf %39, %2 : vector<16x16xf32>
    %41 = vector.extract_strided_slice %26 {offsets = [0, 24], sizes = [16, 8], strides = [1, 1]} : vector<16x32xf32> to vector<16x8xf32>
    %42 = vector.extract_strided_slice %27 {offsets = [0, 24], sizes = [16, 8], strides = [1, 1]} : vector<16x32xf32> to vector<16x8xf32>
    %cst_34 = arith.constant dense<0.000000e+00> : vector<16x16xf32>
    %43 = tpu.matmul %41, %42, %cst_34 {dimension_numbers = #tpu.dot_dimension_numbers<[1], [1], [0], [0], [0, 0, 1, 0], [], []>} : vector<16x8xf32>, vector<16x8xf32>, vector<16x16xf32> -> vector<16x16xf32>
    %44 = arith.addf %43, %2 : vector<16x16xf32>
    %cst_35 = arith.constant dense<0xFF800000> : vector<16xf32>
    %45 = vector.multi_reduction <maximumf>, %32, %cst_35 [1] : vector<16x16xf32> to vector<16xf32>
    %46 = vector.shape_cast %45 : vector<16xf32> to vector<16x1xf32>
    %47 = vector.broadcast %46 : vector<16x1xf32> to vector<16x16xf32>
    %48 = arith.subf %32, %47 : vector<16x16xf32>
    %49 = math.exp %48 : vector<16x16xf32>
    %cst_36 = arith.constant dense<0.000000e+00> : vector<16xf32>
    %50 = vector.multi_reduction <add>, %49, %cst_36 [1] : vector<16x16xf32> to vector<16xf32>
    %51 = vector.shape_cast %50 : vector<16xf32> to vector<16x1xf32>
    %52 = tpu.reciprocal %51 {approx = true} : vector<16x1xf32> -> vector<16x1xf32>
    %53 = vector.broadcast %52 : vector<16x1xf32> to vector<16x16xf32>
    %54 = arith.mulf %49, %53 : vector<16x16xf32>
    %cst_37 = arith.constant dense<0xFF800000> : vector<16xf32>
    %55 = vector.multi_reduction <maximumf>, %36, %cst_37 [1] : vector<16x16xf32> to vector<16xf32>
    %56 = vector.shape_cast %55 : vector<16xf32> to vector<16x1xf32>
    %57 = vector.broadcast %56 : vector<16x1xf32> to vector<16x16xf32>
    %58 = arith.subf %36, %57 : vector<16x16xf32>
    %59 = math.exp %58 : vector<16x16xf32>
    %cst_38 = arith.constant dense<0.000000e+00> : vector<16xf32>
    %60 = vector.multi_reduction <add>, %59, %cst_38 [1] : vector<16x16xf32> to vector<16xf32>
    %61 = vector.shape_cast %60 : vector<16xf32> to vector<16x1xf32>
    %62 = tpu.reciprocal %61 {approx = true} : vector<16x1xf32> -> vector<16x1xf32>
    %63 = vector.broadcast %62 : vector<16x1xf32> to vector<16x16xf32>
    %64 = arith.mulf %59, %63 : vector<16x16xf32>
    %cst_39 = arith.constant dense<0xFF800000> : vector<16xf32>
    %65 = vector.multi_reduction <maximumf>, %40, %cst_39 [1] : vector<16x16xf32> to vector<16xf32>
    %66 = vector.shape_cast %65 : vector<16xf32> to vector<16x1xf32>
    %67 = vector.broadcast %66 : vector<16x1xf32> to vector<16x16xf32>
    %68 = arith.subf %40, %67 : vector<16x16xf32>
    %69 = math.exp %68 : vector<16x16xf32>
    %cst_40 = arith.constant dense<0.000000e+00> : vector<16xf32>
    %70 = vector.multi_reduction <add>, %69, %cst_40 [1] : vector<16x16xf32> to vector<16xf32>
    %71 = vector.shape_cast %70 : vector<16xf32> to vector<16x1xf32>
    %72 = tpu.reciprocal %71 {approx = true} : vector<16x1xf32> -> vector<16x1xf32>
    %73 = vector.broadcast %72 : vector<16x1xf32> to vector<16x16xf32>
    %74 = arith.mulf %69, %73 : vector<16x16xf32>
    %cst_41 = arith.constant dense<0xFF800000> : vector<16xf32>
    %75 = vector.multi_reduction <maximumf>, %44, %cst_41 [1] : vector<16x16xf32> to vector<16xf32>
    %76 = vector.shape_cast %75 : vector<16xf32> to vector<16x1xf32>
    %77 = vector.broadcast %76 : vector<16x1xf32> to vector<16x16xf32>
    %78 = arith.subf %44, %77 : vector<16x16xf32>
    %79 = math.exp %78 : vector<16x16xf32>
    %cst_42 = arith.constant dense<0.000000e+00> : vector<16xf32>
    %80 = vector.multi_reduction <add>, %79, %cst_42 [1] : vector<16x16xf32> to vector<16xf32>
    %81 = vector.shape_cast %80 : vector<16xf32> to vector<16x1xf32>
    %82 = tpu.reciprocal %81 {approx = true} : vector<16x1xf32> -> vector<16x1xf32>
    %83 = vector.broadcast %82 : vector<16x1xf32> to vector<16x16xf32>
    %84 = arith.mulf %79, %83 : vector<16x16xf32>
    %85 = vector.extract_strided_slice %28 {offsets = [0, 0], sizes = [16, 8], strides = [1, 1]} : vector<16x32xf32> to vector<16x8xf32>
    %cst_43 = arith.constant dense<0.000000e+00> : vector<16x8xf32>
    %86 = tpu.matmul %54, %85, %cst_43 {dimension_numbers = #tpu.dot_dimension_numbers<[1], [0], [0], [1], [0, 0, 1, 1], [], []>} : vector<16x16xf32>, vector<16x8xf32>, vector<16x8xf32> -> vector<16x8xf32>
    %87 = vector.extract_strided_slice %28 {offsets = [0, 8], sizes = [16, 8], strides = [1, 1]} : vector<16x32xf32> to vector<16x8xf32>
    %cst_44 = arith.constant dense<0.000000e+00> : vector<16x8xf32>
    %88 = tpu.matmul %64, %87, %cst_44 {dimension_numbers = #tpu.dot_dimension_numbers<[1], [0], [0], [1], [0, 0, 1, 1], [], []>} : vector<16x16xf32>, vector<16x8xf32>, vector<16x8xf32> -> vector<16x8xf32>
    %89 = vector.extract_strided_slice %28 {offsets = [0, 16], sizes = [16, 8], strides = [1, 1]} : vector<16x32xf32> to vector<16x8xf32>
    %cst_45 = arith.constant dense<0.000000e+00> : vector<16x8xf32>
    %90 = tpu.matmul %74, %89, %cst_45 {dimension_numbers = #tpu.dot_dimension_numbers<[1], [0], [0], [1], [0, 0, 1, 1], [], []>} : vector<16x16xf32>, vector<16x8xf32>, vector<16x8xf32> -> vector<16x8xf32>
    %91 = vector.extract_strided_slice %28 {offsets = [0, 24], sizes = [16, 8], strides = [1, 1]} : vector<16x32xf32> to vector<16x8xf32>
    %cst_46 = arith.constant dense<0.000000e+00> : vector<16x8xf32>
    %92 = tpu.matmul %84, %91, %cst_46 {dimension_numbers = #tpu.dot_dimension_numbers<[1], [0], [0], [1], [0, 0, 1, 1], [], []>} : vector<16x16xf32>, vector<16x8xf32>, vector<16x8xf32> -> vector<16x8xf32>
    %93 = tpu.concatenate %86, %88, %90, %92 in 1 : vector<16x8xf32>, vector<16x8xf32>, vector<16x8xf32>, vector<16x8xf32> -> vector<16x32xf32>
    %cst_47 = arith.constant dense<0.000000e+00> : vector<16x32xf32>
    %94 = tpu.matmul %93, %5, %cst_47 {dimension_numbers = #tpu.dot_dimension_numbers<[1], [0], [0], [1], [0, 0, 1, 1], [], []>} : vector<16x32xf32>, vector<32x32xf32>, vector<16x32xf32> -> vector<16x32xf32>
    %95 = vector.broadcast %12 : vector<1x32xf32> to vector<16x32xf32>
    %96 = arith.addf %94, %95 : vector<16x32xf32>
    %97 = arith.addf %0, %96 : vector<16x32xf32>
    %cst_48 = arith.constant dense<0.000000e+00> : vector<16xf32>
    %98 = vector.multi_reduction <add>, %97, %cst_48 [1] : vector<16x32xf32> to vector<16xf32>
    %99 = vector.shape_cast %98 : vector<16xf32> to vector<16x1xf32>
    %cst_49 = arith.constant 3.200000e+01 : f32
    %100 = vector.broadcast %cst_49 : f32 to vector<16x1xf32>
    %101 = arith.divf %99, %100 : vector<16x1xf32>
    %102 = vector.broadcast %101 : vector<16x1xf32> to vector<16x32xf32>
    %103 = arith.subf %97, %102 : vector<16x32xf32>
    %104 = arith.mulf %103, %103 : vector<16x32xf32>
    %cst_50 = arith.constant dense<0.000000e+00> : vector<16xf32>
    %105 = vector.multi_reduction <add>, %104, %cst_50 [1] : vector<16x32xf32> to vector<16xf32>
    %106 = vector.shape_cast %105 : vector<16xf32> to vector<16x1xf32>
    %cst_51 = arith.constant 3.200000e+01 : f32
    %107 = vector.broadcast %cst_51 : f32 to vector<16x1xf32>
    %108 = arith.divf %106, %107 : vector<16x1xf32>
    %109 = vector.broadcast %101 : vector<16x1xf32> to vector<16x32xf32>
    %110 = arith.subf %97, %109 : vector<16x32xf32>
    %cst_52 = arith.constant 9.99999974E-6 : f32
    %111 = vector.broadcast %cst_52 : f32 to vector<16x1xf32>
    %112 = arith.addf %108, %111 : vector<16x1xf32>
    %113 = math.rsqrt %112 : vector<16x1xf32>
    %114 = vector.broadcast %113 : vector<16x1xf32> to vector<16x32xf32>
    %115 = arith.mulf %110, %114 : vector<16x32xf32>
    %116 = vector.broadcast %15 : vector<1x32xf32> to vector<16x32xf32>
    %117 = arith.mulf %115, %116 : vector<16x32xf32>
    %118 = vector.broadcast %16 : vector<1x32xf32> to vector<16x32xf32>
    %119 = arith.addf %117, %118 : vector<16x32xf32>
    %cst_53 = arith.constant dense<0.000000e+00> : vector<16x32xf32>
    %120 = tpu.matmul %119, %6, %cst_53 {dimension_numbers = #tpu.dot_dimension_numbers<[1], [0], [0], [1], [0, 0, 1, 1], [], []>} : vector<16x32xf32>, vector<32x32xf32>, vector<16x32xf32> -> vector<16x32xf32>
    %121 = vector.extract_strided_slice %11 {offsets = [0, 0], sizes = [1, 32], strides = [1, 1]} : vector<1x96xf32> to vector<1x32xf32>
    %122 = vector.broadcast %121 : vector<1x32xf32> to vector<16x32xf32>
    %123 = arith.addf %120, %122 : vector<16x32xf32>
    %cst_54 = arith.constant dense<0.000000e+00> : vector<16x64xf32>
    %124 = tpu.matmul %1, %7, %cst_54 {dimension_numbers = #tpu.dot_dimension_numbers<[1], [0], [0], [1], [0, 0, 1, 1], [], []>} : vector<16x32xf32>, vector<32x64xf32>, vector<16x64xf32> -> vector<16x64xf32>
    %125 = vector.extract_strided_slice %11 {offsets = [0, 32], sizes = [1, 64], strides = [1, 1]} : vector<1x96xf32> to vector<1x64xf32>
    %126 = vector.broadcast %125 : vector<1x64xf32> to vector<16x64xf32>
    %127 = arith.addf %124, %126 : vector<16x64xf32>
    %128 = vector.extract_strided_slice %127 {offsets = [0, 0], sizes = [16, 32], strides = [1, 1]} : vector<16x64xf32> to vector<16x32xf32>
    %129 = vector.extract_strided_slice %127 {offsets = [0, 32], sizes = [16, 32], strides = [1, 1]} : vector<16x64xf32> to vector<16x32xf32>
    %130 = vector.extract_strided_slice %123 {offsets = [0, 0], sizes = [16, 8], strides = [1, 1]} : vector<16x32xf32> to vector<16x8xf32>
    %131 = vector.extract_strided_slice %128 {offsets = [0, 0], sizes = [16, 8], strides = [1, 1]} : vector<16x32xf32> to vector<16x8xf32>
    %cst_55 = arith.constant dense<0.000000e+00> : vector<16x16xf32>
    %132 = tpu.matmul %130, %131, %cst_55 {dimension_numbers = #tpu.dot_dimension_numbers<[1], [1], [0], [0], [0, 0, 1, 0], [], []>} : vector<16x8xf32>, vector<16x8xf32>, vector<16x16xf32> -> vector<16x16xf32>
    %133 = arith.addf %132, %3 : vector<16x16xf32>
    %134 = vector.extract_strided_slice %123 {offsets = [0, 8], sizes = [16, 8], strides = [1, 1]} : vector<16x32xf32> to vector<16x8xf32>
    %135 = vector.extract_strided_slice %128 {offsets = [0, 8], sizes = [16, 8], strides = [1, 1]} : vector<16x32xf32> to vector<16x8xf32>
    %cst_56 = arith.constant dense<0.000000e+00> : vector<16x16xf32>
    %136 = tpu.matmul %134, %135, %cst_56 {dimension_numbers = #tpu.dot_dimension_numbers<[1], [1], [0], [0], [0, 0, 1, 0], [], []>} : vector<16x8xf32>, vector<16x8xf32>, vector<16x16xf32> -> vector<16x16xf32>
    %137 = arith.addf %136, %3 : vector<16x16xf32>
    %138 = vector.extract_strided_slice %123 {offsets = [0, 16], sizes = [16, 8], strides = [1, 1]} : vector<16x32xf32> to vector<16x8xf32>
    %139 = vector.extract_strided_slice %128 {offsets = [0, 16], sizes = [16, 8], strides = [1, 1]} : vector<16x32xf32> to vector<16x8xf32>
    %cst_57 = arith.constant dense<0.000000e+00> : vector<16x16xf32>
    %140 = tpu.matmul %138, %139, %cst_57 {dimension_numbers = #tpu.dot_dimension_numbers<[1], [1], [0], [0], [0, 0, 1, 0], [], []>} : vector<16x8xf32>, vector<16x8xf32>, vector<16x16xf32> -> vector<16x16xf32>
    %141 = arith.addf %140, %3 : vector<16x16xf32>
    %142 = vector.extract_strided_slice %123 {offsets = [0, 24], sizes = [16, 8], strides = [1, 1]} : vector<16x32xf32> to vector<16x8xf32>
    %143 = vector.extract_strided_slice %128 {offsets = [0, 24], sizes = [16, 8], strides = [1, 1]} : vector<16x32xf32> to vector<16x8xf32>
    %cst_58 = arith.constant dense<0.000000e+00> : vector<16x16xf32>
    %144 = tpu.matmul %142, %143, %cst_58 {dimension_numbers = #tpu.dot_dimension_numbers<[1], [1], [0], [0], [0, 0, 1, 0], [], []>} : vector<16x8xf32>, vector<16x8xf32>, vector<16x16xf32> -> vector<16x16xf32>
    %145 = arith.addf %144, %3 : vector<16x16xf32>
    %cst_59 = arith.constant dense<0xFF800000> : vector<16xf32>
    %146 = vector.multi_reduction <maximumf>, %133, %cst_59 [1] : vector<16x16xf32> to vector<16xf32>
    %147 = vector.shape_cast %146 : vector<16xf32> to vector<16x1xf32>
    %148 = vector.broadcast %147 : vector<16x1xf32> to vector<16x16xf32>
    %149 = arith.subf %133, %148 : vector<16x16xf32>
    %150 = math.exp %149 : vector<16x16xf32>
    %cst_60 = arith.constant dense<0.000000e+00> : vector<16xf32>
    %151 = vector.multi_reduction <add>, %150, %cst_60 [1] : vector<16x16xf32> to vector<16xf32>
    %152 = vector.shape_cast %151 : vector<16xf32> to vector<16x1xf32>
    %153 = tpu.reciprocal %152 {approx = true} : vector<16x1xf32> -> vector<16x1xf32>
    %154 = vector.broadcast %153 : vector<16x1xf32> to vector<16x16xf32>
    %155 = arith.mulf %150, %154 : vector<16x16xf32>
    %cst_61 = arith.constant dense<0xFF800000> : vector<16xf32>
    %156 = vector.multi_reduction <maximumf>, %137, %cst_61 [1] : vector<16x16xf32> to vector<16xf32>
    %157 = vector.shape_cast %156 : vector<16xf32> to vector<16x1xf32>
    %158 = vector.broadcast %157 : vector<16x1xf32> to vector<16x16xf32>
    %159 = arith.subf %137, %158 : vector<16x16xf32>
    %160 = math.exp %159 : vector<16x16xf32>
    %cst_62 = arith.constant dense<0.000000e+00> : vector<16xf32>
    %161 = vector.multi_reduction <add>, %160, %cst_62 [1] : vector<16x16xf32> to vector<16xf32>
    %162 = vector.shape_cast %161 : vector<16xf32> to vector<16x1xf32>
    %163 = tpu.reciprocal %162 {approx = true} : vector<16x1xf32> -> vector<16x1xf32>
    %164 = vector.broadcast %163 : vector<16x1xf32> to vector<16x16xf32>
    %165 = arith.mulf %160, %164 : vector<16x16xf32>
    %cst_63 = arith.constant dense<0xFF800000> : vector<16xf32>
    %166 = vector.multi_reduction <maximumf>, %141, %cst_63 [1] : vector<16x16xf32> to vector<16xf32>
    %167 = vector.shape_cast %166 : vector<16xf32> to vector<16x1xf32>
    %168 = vector.broadcast %167 : vector<16x1xf32> to vector<16x16xf32>
    %169 = arith.subf %141, %168 : vector<16x16xf32>
    %170 = math.exp %169 : vector<16x16xf32>
    %cst_64 = arith.constant dense<0.000000e+00> : vector<16xf32>
    %171 = vector.multi_reduction <add>, %170, %cst_64 [1] : vector<16x16xf32> to vector<16xf32>
    %172 = vector.shape_cast %171 : vector<16xf32> to vector<16x1xf32>
    %173 = tpu.reciprocal %172 {approx = true} : vector<16x1xf32> -> vector<16x1xf32>
    %174 = vector.broadcast %173 : vector<16x1xf32> to vector<16x16xf32>
    %175 = arith.mulf %170, %174 : vector<16x16xf32>
    %cst_65 = arith.constant dense<0xFF800000> : vector<16xf32>
    %176 = vector.multi_reduction <maximumf>, %145, %cst_65 [1] : vector<16x16xf32> to vector<16xf32>
    %177 = vector.shape_cast %176 : vector<16xf32> to vector<16x1xf32>
    %178 = vector.broadcast %177 : vector<16x1xf32> to vector<16x16xf32>
    %179 = arith.subf %145, %178 : vector<16x16xf32>
    %180 = math.exp %179 : vector<16x16xf32>
    %cst_66 = arith.constant dense<0.000000e+00> : vector<16xf32>
    %181 = vector.multi_reduction <add>, %180, %cst_66 [1] : vector<16x16xf32> to vector<16xf32>
    %182 = vector.shape_cast %181 : vector<16xf32> to vector<16x1xf32>
    %183 = tpu.reciprocal %182 {approx = true} : vector<16x1xf32> -> vector<16x1xf32>
    %184 = vector.broadcast %183 : vector<16x1xf32> to vector<16x16xf32>
    %185 = arith.mulf %180, %184 : vector<16x16xf32>
    %186 = vector.extract_strided_slice %129 {offsets = [0, 0], sizes = [16, 8], strides = [1, 1]} : vector<16x32xf32> to vector<16x8xf32>
    %cst_67 = arith.constant dense<0.000000e+00> : vector<16x8xf32>
    %187 = tpu.matmul %155, %186, %cst_67 {dimension_numbers = #tpu.dot_dimension_numbers<[1], [0], [0], [1], [0, 0, 1, 1], [], []>} : vector<16x16xf32>, vector<16x8xf32>, vector<16x8xf32> -> vector<16x8xf32>
    %188 = vector.extract_strided_slice %129 {offsets = [0, 8], sizes = [16, 8], strides = [1, 1]} : vector<16x32xf32> to vector<16x8xf32>
    %cst_68 = arith.constant dense<0.000000e+00> : vector<16x8xf32>
    %189 = tpu.matmul %165, %188, %cst_68 {dimension_numbers = #tpu.dot_dimension_numbers<[1], [0], [0], [1], [0, 0, 1, 1], [], []>} : vector<16x16xf32>, vector<16x8xf32>, vector<16x8xf32> -> vector<16x8xf32>
    %190 = vector.extract_strided_slice %129 {offsets = [0, 16], sizes = [16, 8], strides = [1, 1]} : vector<16x32xf32> to vector<16x8xf32>
    %cst_69 = arith.constant dense<0.000000e+00> : vector<16x8xf32>
    %191 = tpu.matmul %175, %190, %cst_69 {dimension_numbers = #tpu.dot_dimension_numbers<[1], [0], [0], [1], [0, 0, 1, 1], [], []>} : vector<16x16xf32>, vector<16x8xf32>, vector<16x8xf32> -> vector<16x8xf32>
    %192 = vector.extract_strided_slice %129 {offsets = [0, 24], sizes = [16, 8], strides = [1, 1]} : vector<16x32xf32> to vector<16x8xf32>
    %cst_70 = arith.constant dense<0.000000e+00> : vector<16x8xf32>
    %193 = tpu.matmul %185, %192, %cst_70 {dimension_numbers = #tpu.dot_dimension_numbers<[1], [0], [0], [1], [0, 0, 1, 1], [], []>} : vector<16x16xf32>, vector<16x8xf32>, vector<16x8xf32> -> vector<16x8xf32>
    %194 = tpu.concatenate %187, %189, %191, %193 in 1 : vector<16x8xf32>, vector<16x8xf32>, vector<16x8xf32>, vector<16x8xf32> -> vector<16x32xf32>
    %cst_71 = arith.constant dense<0.000000e+00> : vector<16x32xf32>
    %195 = tpu.matmul %194, %8, %cst_71 {dimension_numbers = #tpu.dot_dimension_numbers<[1], [0], [0], [1], [0, 0, 1, 1], [], []>} : vector<16x32xf32>, vector<32x32xf32>, vector<16x32xf32> -> vector<16x32xf32>
    %196 = vector.broadcast %13 : vector<1x32xf32> to vector<16x32xf32>
    %197 = arith.addf %195, %196 : vector<16x32xf32>
    %198 = vector.extract_strided_slice %155 {offsets = [0, 0], sizes = [16, 8], strides = [1, 1]} : vector<16x16xf32> to vector<16x8xf32>
    %199 = vector.extract_strided_slice %155 {offsets = [0, 8], sizes = [16, 8], strides = [1, 1]} : vector<16x16xf32> to vector<16x8xf32>
    %200 = arith.addf %198, %199 : vector<16x8xf32>
    %201 = vector.extract_strided_slice %165 {offsets = [0, 0], sizes = [16, 8], strides = [1, 1]} : vector<16x16xf32> to vector<16x8xf32>
    %202 = vector.extract_strided_slice %165 {offsets = [0, 8], sizes = [16, 8], strides = [1, 1]} : vector<16x16xf32> to vector<16x8xf32>
    %203 = arith.addf %201, %202 : vector<16x8xf32>
    %204 = vector.extract_strided_slice %175 {offsets = [0, 0], sizes = [16, 8], strides = [1, 1]} : vector<16x16xf32> to vector<16x8xf32>
    %205 = vector.extract_strided_slice %175 {offsets = [0, 8], sizes = [16, 8], strides = [1, 1]} : vector<16x16xf32> to vector<16x8xf32>
    %206 = arith.addf %204, %205 : vector<16x8xf32>
    %207 = vector.extract_strided_slice %185 {offsets = [0, 0], sizes = [16, 8], strides = [1, 1]} : vector<16x16xf32> to vector<16x8xf32>
    %208 = vector.extract_strided_slice %185 {offsets = [0, 8], sizes = [16, 8], strides = [1, 1]} : vector<16x16xf32> to vector<16x8xf32>
    %209 = arith.addf %207, %208 : vector<16x8xf32>
    %210 = tpu.concatenate %200, %203, %206, %209 in 1 : vector<16x8xf32>, vector<16x8xf32>, vector<16x8xf32>, vector<16x8xf32> -> vector<16x32xf32>
    %c0_72 = arith.constant 0 : index
    %c32_73 = arith.constant 32 : index
    %211 = vector.load %arg3[%c0_72, %c32_73] : memref<16x64xf32, #tpu.memory_space<vmem>>, vector<16x32xf32>
    tpu.vector_store %arg3[%c0_72, %c32_73], %210 {strides = array<i32>} : memref<16x64xf32, #tpu.memory_space<vmem>>, vector<16x32xf32>,
    %212 = arith.addf %119, %197 : vector<16x32xf32>
    %cst_74 = arith.constant dense<0.000000e+00> : vector<16xf32>
    %213 = vector.multi_reduction <add>, %212, %cst_74 [1] : vector<16x32xf32> to vector<16xf32>
    %214 = vector.shape_cast %213 : vector<16xf32> to vector<16x1xf32>
    %cst_75 = arith.constant 3.200000e+01 : f32
    %215 = vector.broadcast %cst_75 : f32 to vector<16x1xf32>
    %216 = arith.divf %214, %215 : vector<16x1xf32>
    %217 = vector.broadcast %216 : vector<16x1xf32> to vector<16x32xf32>
    %218 = arith.subf %212, %217 : vector<16x32xf32>
    %219 = arith.mulf %218, %218 : vector<16x32xf32>
    %cst_76 = arith.constant dense<0.000000e+00> : vector<16xf32>
    %220 = vector.multi_reduction <add>, %219, %cst_76 [1] : vector<16x32xf32> to vector<16xf32>
    %221 = vector.shape_cast %220 : vector<16xf32> to vector<16x1xf32>
    %cst_77 = arith.constant 3.200000e+01 : f32
    %222 = vector.broadcast %cst_77 : f32 to vector<16x1xf32>
    %223 = arith.divf %221, %222 : vector<16x1xf32>
    %224 = vector.broadcast %216 : vector<16x1xf32> to vector<16x32xf32>
    %225 = arith.subf %212, %224 : vector<16x32xf32>
    %cst_78 = arith.constant 9.99999974E-6 : f32
    %226 = vector.broadcast %cst_78 : f32 to vector<16x1xf32>
    %227 = arith.addf %223, %226 : vector<16x1xf32>
    %228 = math.rsqrt %227 : vector<16x1xf32>
    %229 = vector.broadcast %228 : vector<16x1xf32> to vector<16x32xf32>
    %230 = arith.mulf %225, %229 : vector<16x32xf32>
    %231 = vector.broadcast %17 : vector<1x32xf32> to vector<16x32xf32>
    %232 = arith.mulf %230, %231 : vector<16x32xf32>
    %233 = vector.broadcast %18 : vector<1x32xf32> to vector<16x32xf32>
    %234 = arith.addf %232, %233 : vector<16x32xf32>
    %cst_79 = arith.constant dense<0.000000e+00> : vector<16x64xf32>
    %235 = tpu.matmul %234, %9, %cst_79 {dimension_numbers = #tpu.dot_dimension_numbers<[1], [0], [0], [1], [0, 0, 1, 1], [], []>} : vector<16x32xf32>, vector<32x64xf32>, vector<16x64xf32> -> vector<16x64xf32>
    %236 = vector.broadcast %21 : vector<1x64xf32> to vector<16x64xf32>
    %237 = arith.addf %235, %236 : vector<16x64xf32>
    %cst_80 = arith.constant 0.000000e+00 : f32
    %238 = vector.broadcast %cst_80 : f32 to vector<16x64xf32>
    %239 = arith.maximumf %237, %238 : vector<16x64xf32>
    %cst_81 = arith.constant dense<0.000000e+00> : vector<16x32xf32>
    %240 = tpu.matmul %239, %22, %cst_81 {dimension_numbers = #tpu.dot_dimension_numbers<[1], [0], [0], [1], [0, 0, 1, 1], [], []>} : vector<16x64xf32>, vector<64x32xf32>, vector<16x32xf32> -> vector<16x32xf32>
    %241 = vector.broadcast %14 : vector<1x32xf32> to vector<16x32xf32>
    %242 = arith.addf %240, %241 : vector<16x32xf32>
    %243 = arith.addf %234, %242 : vector<16x32xf32>
    %cst_82 = arith.constant dense<0.000000e+00> : vector<16xf32>
    %244 = vector.multi_reduction <add>, %243, %cst_82 [1] : vector<16x32xf32> to vector<16xf32>
    %245 = vector.shape_cast %244 : vector<16xf32> to vector<16x1xf32>
    %cst_83 = arith.constant 3.200000e+01 : f32
    %246 = vector.broadcast %cst_83 : f32 to vector<16x1xf32>
    %247 = arith.divf %245, %246 : vector<16x1xf32>
    %248 = vector.broadcast %247 : vector<16x1xf32> to vector<16x32xf32>
    %249 = arith.subf %243, %248 : vector<16x32xf32>
    %250 = arith.mulf %249, %249 : vector<16x32xf32>
    %cst_84 = arith.constant dense<0.000000e+00> : vector<16xf32>
    %251 = vector.multi_reduction <add>, %250, %cst_84 [1] : vector<16x32xf32> to vector<16xf32>
    %252 = vector.shape_cast %251 : vector<16xf32> to vector<16x1xf32>
    %cst_85 = arith.constant 3.200000e+01 : f32
    %253 = vector.broadcast %cst_85 : f32 to vector<16x1xf32>
    %254 = arith.divf %252, %253 : vector<16x1xf32>
    %255 = vector.broadcast %247 : vector<16x1xf32> to vector<16x32xf32>
    %256 = arith.subf %243, %255 : vector<16x32xf32>
    %cst_86 = arith.constant 9.99999974E-6 : f32
    %257 = vector.broadcast %cst_86 : f32 to vector<16x1xf32>
    %258 = arith.addf %254, %257 : vector<16x1xf32>
    %259 = math.rsqrt %258 : vector<16x1xf32>
    %260 = vector.broadcast %259 : vector<16x1xf32> to vector<16x32xf32>
    %261 = arith.mulf %256, %260 : vector<16x32xf32>
    %262 = vector.broadcast %19 : vector<1x32xf32> to vector<16x32xf32>
    %263 = arith.mulf %261, %262 : vector<16x32xf32>
    %264 = vector.broadcast %20 : vector<1x32xf32> to vector<16x32xf32>
    %265 = arith.addf %263, %264 : vector<16x32xf32>
    %c0_87 = arith.constant 0 : index
    %c0_88 = arith.constant 0 : index
    %266 = vector.load %arg3[%c0_87, %c0_88] : memref<16x64xf32, #tpu.memory_space<vmem>>, vector<16x32xf32>
    tpu.vector_store %arg3[%c0_87, %c0_88], %265 {strides = array<i32>} : memref<16x64xf32, #tpu.memory_space<vmem>>, vector<16x32xf32>,
    return
  }
}

</mosaic_0001>

<llo_original>
// kernel: decoder_layer.1
$region0: #{decoder_layer.1}
  #allocation0 [shape = 'u32[]', space=smem, size = 0x4, offset = 0x4, fixed_abs, tag = 'smem constant byte address 0x4 - core index']
  #allocation1 [shape = 'u32[144,128]{1,0:T(1,128)}', space=vmem, size = 0x12000, scoped, tag = 'internal scratch']
  %s0 = inlined_call_operand.vmem [shape: f32[16,96], index: 0, kind: input, shape index: {}]
  %s1 = inlined_call_operand.vmem [shape: f32[32,320], index: 1, kind: input, shape index: {}]
  %s2 = inlined_call_operand.vmem [shape: f32[70,96], index: 2, kind: input, shape index: {}]
  %s3 = inlined_call_operand.vmem [shape: f32[16,64], index: 3, kind: output, shape index: {}]
  %s4 = sld [smem:[#allocation0]]
  $region22: #{decoder_layer.1} parent=0
    _
  %s6 = ssub.s32 1, %s4
  %s7 = scalar_select 0, %s6, %s4
  // Predicated region
  $region2: #{decoder_layer.1} parent=0 // pred_check
    _
  $region3: #{decoder_layer.1} parent=0 // pred_check_branch
    %9 = sbr.rel (0) target = $region5
  $region4: #{decoder_layer.1} parent=0 // pred_region
    _
  $region5: #{decoder_layer.1} parent=0 // pred_fallthru
    _
  // Predicated region
  $region6: #{decoder_layer.1} parent=0 // pred_check
    _
  $region7: #{decoder_layer.1} parent=0 // pred_check_branch
    %11 = sbr.rel (0) target = $region9
  $region8: #{decoder_layer.1} parent=0 // pred_region
    _
  $region9: #{decoder_layer.1} parent=0 // pred_fallthru
    _
  // Predicated region
  $region10: #{decoder_layer.1} parent=0 // pred_check
    _
  $region11: #{decoder_layer.1} parent=0 // pred_check_branch
    %13 = sbr.rel (0) target = $region13
  $region12: #{decoder_layer.1} parent=0 // pred_region
    _
  $region13: #{decoder_layer.1} parent=0 // pred_fallthru
    _
  %v14 = vld [vmem:[%s0] sm:$0xff]
  %v15 = vld [vmem:[%s0 + $0x8] sm:$0xff]
  %v16 = vld [vmem:[%s1] sm:$0xff]
  %v17 = vld [vmem:[%s1 + $0x18] sm:$0xff]
  %v18 = vld [vmem:[%s1 + $0x30] sm:$0xff]
  %v19 = vld [vmem:[%s1 + $0x48] sm:$0xff]
  %v20 = vld [vmem:[%s1 + $0x8] sm:$0xff]
  %v21 = vld [vmem:[%s1 + $0x20] sm:$0xff]
  %v22 = vld [vmem:[%s1 + $0x38] sm:$0xff]
  %v23 = vld [vmem:[%s1 + $0x50] sm:$0xff]
  %v24 = vld [vmem:[%s1 + $0x10] sm:$0xff]
  %v25 = vld [vmem:[%s1 + $0x28] sm:$0xff]
  %v26 = vld [vmem:[%s1 + $0x40] sm:$0xff]
  %v27 = vld [vmem:[%s1 + $0x58] sm:$0xff]
  %v28 = vld [vmem:[%s2] sm:$0x1]
  %v29 = vld [vmem:[%s2 + $0x1] sm:$0x1]
  %v30 = vld [vmem:[%s2 + $0x2] sm:$0x1]
  %v31 = vld [vmem:[%s2 + $0x3] sm:$0x1]
  %v32 = vld [vmem:[%s2 + $0x4] sm:$0x1]
  %v33 = vld [vmem:[%s2 + $0x5] sm:$0x1]
  %v34 = vld [vmem:[%s2 + $0x6] sm:$0xff]
  %v35 = vld [vmem:[%s2 + $0xe] sm:$0xff]
  %v36 = vld [vmem:[%s2 + $0x16] sm:$0xff]
  %v37 = vld [vmem:[%s2 + $0x1e] sm:$0xff]
  %v38 = vld [vmem:[%s2 + $0x26] sm:$0xff]
  %v39 = vld [vmem:[%s2 + $0x2e] sm:$0xff]
  %v40 = vld [vmem:[%s2 + $0x36] sm:$0xff]
  %v41 = vld [vmem:[%s2 + $0x3e] sm:$0xff]
  %v42 = vlaneseq
  %v43 = vshrl.u32 %v42, 7
  %v44 = vsub.s32 0, %v43
  %v45 = vrot.slane %v28, %v44
  %vm46 = vcmask 261120
  %v48 = vsel %vm46, %v14, 0
  %v51 = vsel %vm46, %v15, 0
  %53 = vmatprep.subr.mxu0 0.0
  %54 = vmatpush1.msra.mxu0 %v16
  %55 = vmatprep.subr.mxu0 0.0
  %56 = vmatpush1.msra.mxu0 %v17
  %57 = vmatprep.subr.mxu0 0.0
  %58 = vmatpush1.msra.mxu0 %v18
  %59 = vmatprep.subr.mxu0 0.0
  %60 = vmatpush1.msra.mxu0 %v19
  %61 = vmatprep.subr.mxu0 0.0
  %62 = vmatpush1.msra.mxu0 0.0
  %63 = vmatprep.subr.mxu0 0.0
  %64 = vmatpush1.msra.mxu0 0.0
  %65 = vmatprep.subr.mxu0 0.0
  %66 = vmatpush1.msra.mxu0 0.0
  %67 = vmatprep.subr.mxu0 0.0
  %68 = vmatpush1.msra.mxu0 0.0
  %69 = vmatprep.subr.mxu0 0.0
  %70 = vmatpush1.msra.mxu0 0.0
  %71 = vmatprep.subr.mxu0 0.0
  %72 = vmatpush1.msra.mxu0 0.0
  %73 = vmatprep.subr.mxu0 0.0
  %74 = vmatpush1.msra.mxu0 0.0
  %75 = vmatprep.subr.mxu0 0.0
  %76 = vmatpush1.msra.mxu0 0.0
  %77 = vmatprep.subr.mxu0 0.0
  %78 = vmatpush1.msra.mxu0 0.0
  %79 = vmatprep.subr.mxu0 0.0
  %80 = vmatpush1.msra.mxu0 0.0
  %81 = vmatprep.subr.mxu0 0.0
  %82 = vmatpush1.msra.mxu0 0.0
  %83 = vmatprep.subr.mxu0 0.0
  %84 = vmatpush1.msra.mxu0 0.0
  %85 = vmatprep.subr.mxu0 0.0
  %86 = vmatpush1.msra.mxu0 0.0
  %87 = vmatprep.subr.mxu0 0.0
  %88 = vmatpush1.msra.mxu0 0.0
  %89 = vmatprep.subr.mxu0 0.0
  %90 = vmatpush1.msra.mxu0 0.0
  %91 = vmatprep.subr.mxu0 0.0
  %92 = vmatpush1.msra.mxu0 0.0
  %93 = vmatprep.subr.mxu0 0.0
  %94 = vmatpush1.msra.mxu0 0.0
  %95 = vmatprep.subr.mxu0 0.0
  %96 = vmatpush1.msra.mxu0 0.0
  %97 = vmatprep.subr.mxu0 0.0
  %98 = vmatpush1.msra.mxu0 0.0
  %99 = vmatprep.subr.mxu0 0.0
  %100 = vmatpush1.msra.mxu0 0.0
  %101 = vmatprep.subr.mxu0 0.0
  %102 = vmatpush1.msra.mxu0 0.0
  %103 = vmatprep.subr.mxu0 0.0
  %104 = vmatpush1.msra.mxu0 0.0
  %105 = vmatprep.subr.mxu0 0.0
  %106 = vmatpush1.msra.mxu0 0.0
  %107 = vmatprep.subr.mxu0 0.0
  %108 = vmatpush1.msra.mxu0 0.0
  %109 = vmatprep.subr.mxu0 0.0
  %110 = vmatpush1.msra.mxu0 0.0
  %111 = vmatprep.subr.mxu0 0.0
  %112 = vmatpush1.msra.mxu0 0.0
  %113 = vmatprep.subr.mxu0 0.0
  %114 = vmatpush1.msra.mxu0 0.0
  %115 = vmatprep.subr.mxu0 0.0
  %116 = vmatpush1.msra.mxu0 0.0
  %117 = vmatprep.mubr.f32.mxu0 0.0
  %118 = vmatmul.mubr.f32.gmra.mrb[0].mxu0 %v48
  %v119 = vpop.f32.mrb[0].mxu0
  %v120 = vadd.f32 %v45, %v119
  %v121 = vpop.f32.mrb[0].mxu0
  %122 = vmatprep.mubr.f32.mxu0 0.0
  %123 = vmatmul.mubr.f32.gmra.mrb[0].mxu0 %v51
  %v124 = vpop.f32.mrb[0].mxu0
  %v125 = vadd.f32 %v45, %v124
  %v126 = vpop.f32.mrb[0].mxu0
  %127 = vdwg.mxu0
  %130 = vrot.lane.b32.xlu0 %v120, 96
  %v131 = vpop.permute.xlu0 %130
  %132 = vrot.lane.b32.xlu0 %v125, 96
  %v133 = vpop.permute.xlu0 %132
  %134 = vrot.lane.b32.xlu0 %v14, 64
  %v135 = vpop.permute.xlu0 %134
  %136 = vrot.lane.b32.xlu0 %v15, 64
  %v137 = vpop.permute.xlu0 %136
  %vm140 = vcmask 64512
  %v141 = vsel %vm140, %v120, 0
  %v143 = vsel %vm140, %v125, 0
  %v145 = vsel %vm140, %v131, 0
  %v147 = vsel %vm140, %v133, 0
  %149 = vmatprep.subr.mxu0 0.0
  %150 = vmatpush1.xpose.msra.mxu0 %v145
  %151 = vmatprep.subr.mxu0 0.0
  %152 = vmatpush1.xpose.msra.mxu0 %v147
  %153 = vmatprep.subr.mxu0 0.0
  %154 = vmatpush1.xpose.msra.mxu0 0.0
  %155 = vmatprep.subr.mxu0 0.0
  %156 = vmatpush1.xpose.msra.mxu0 0.0
  %157 = vmatprep.subr.mxu0 0.0
  %158 = vmatpush1.xpose.msra.mxu0 0.0
  %159 = vmatprep.subr.mxu0 0.0
  %160 = vmatpush1.xpose.msra.mxu0 0.0
  %161 = vmatprep.subr.mxu0 0.0
  %162 = vmatpush1.xpose.msra.mxu0 0.0
  %163 = vmatprep.subr.mxu0 0.0
  %164 = vmatpush1.xpose.msra.mxu0 0.0
  %165 = vmatprep.subr.mxu0 0.0
  %166 = vmatpush1.xpose.msra.mxu0 0.0
  %167 = vmatprep.subr.mxu0 0.0
  %168 = vmatpush1.xpose.msra.mxu0 0.0
  %169 = vmatprep.subr.mxu0 0.0
  %170 = vmatpush1.xpose.msra.mxu0 0.0
  %171 = vmatprep.subr.mxu0 0.0
  %172 = vmatpush1.xpose.msra.mxu0 0.0
  %173 = vmatprep.subr.mxu0 0.0
  %174 = vmatpush1.xpose.msra.mxu0 0.0
  %175 = vmatprep.subr.mxu0 0.0
  %176 = vmatpush1.xpose.msra.mxu0 0.0
  %177 = vmatprep.subr.mxu0 0.0
  %178 = vmatpush1.xpose.msra.mxu0 0.0
  %179 = vmatprep.subr.mxu0 0.0
  %180 = vmatpush1.xpose.msra.mxu0 0.0
  %181 = vmatprep.subr.mxu0 0.0
  %182 = vmatpush1.xpose.msra.mxu0 0.0
  %183 = vmatprep.subr.mxu0 0.0
  %184 = vmatpush1.xpose.msra.mxu0 0.0
  %185 = vmatprep.subr.mxu0 0.0
  %186 = vmatpush1.xpose.msra.mxu0 0.0
  %187 = vmatprep.subr.mxu0 0.0
  %188 = vmatpush1.xpose.msra.mxu0 0.0
  %189 = vmatprep.subr.mxu0 0.0
  %190 = vmatpush1.xpose.msra.mxu0 0.0
  %191 = vmatprep.subr.mxu0 0.0
  %192 = vmatpush1.xpose.msra.mxu0 0.0
  %193 = vmatprep.subr.mxu0 0.0
  %194 = vmatpush1.xpose.msra.mxu0 0.0
  %195 = vmatprep.subr.mxu0 0.0
  %196 = vmatpush1.xpose.msra.mxu0 0.0
  %197 = vmatprep.subr.mxu0 0.0
  %198 = vmatpush1.xpose.msra.mxu0 0.0
  %199 = vmatprep.subr.mxu0 0.0
  %200 = vmatpush1.xpose.msra.mxu0 0.0
  %201 = vmatprep.subr.mxu0 0.0
  %202 = vmatpush1.xpose.msra.mxu0 0.0
  %203 = vmatprep.subr.mxu0 0.0
  %204 = vmatpush1.xpose.msra.mxu0 0.0
  %205 = vmatprep.subr.mxu0 0.0
  %206 = vmatpush1.xpose.msra.mxu0 0.0
  %207 = vmatprep.subr.mxu0 0.0
  %208 = vmatpush1.xpose.msra.mxu0 0.0
  %209 = vmatprep.subr.mxu0 0.0
  %210 = vmatpush1.xpose.msra.mxu0 0.0
  %211 = vmatprep.subr.mxu0 0.0
  %212 = vmatpush1.xpose.msra.mxu0 0.0
  %213 = vmatprep.mubr.f32.mxu0 0.0
  %214 = vmatmul.mubr.f32.gmra.mrb[0].mxu0 %v141
  %v215 = vpop.f32.mrb[0].mxu0
  %v216 = vadd.f32 %v135, %v215
  %v217 = vpop.f32.mrb[0].mxu0
  %218 = vmatprep.mubr.f32.mxu0 0.0
  %219 = vmatmul.mubr.f32.gmra.mrb[0].mxu0 %v143
  %v220 = vpop.f32.mrb[0].mxu0
  %v221 = vadd.f32 %v137, %v220
  %v222 = vpop.f32.mrb[0].mxu0
  %223 = vdwg.mxu0
  %224 = vrot.lane.b32.xlu0 %v120, 120
  %v225 = vpop.permute.xlu0 %224
  %226 = vrot.lane.b32.xlu0 %v125, 120
  %v227 = vpop.permute.xlu0 %226
  %228 = vrot.lane.b32.xlu0 %v120, 88
  %v229 = vpop.permute.xlu0 %228
  %230 = vrot.lane.b32.xlu0 %v125, 88
  %v231 = vpop.permute.xlu0 %230
  %v232 = vsel %vm140, %v225, 0
  %v234 = vsel %vm140, %v227, 0
  %v236 = vsel %vm140, %v229, 0
  %v238 = vsel %vm140, %v231, 0
  %240 = vmatprep.subr.mxu0 0.0
  %241 = vmatpush1.xpose.msra.mxu0 %v236
  %242 = vmatprep.subr.mxu0 0.0
  %243 = vmatpush1.xpose.msra.mxu0 %v238
  %244 = vmatprep.subr.mxu0 0.0
  %245 = vmatpush1.xpose.msra.mxu0 0.0
  %246 = vmatprep.subr.mxu0 0.0
  %247 = vmatpush1.xpose.msra.mxu0 0.0
  %248 = vmatprep.subr.mxu0 0.0
  %249 = vmatpush1.xpose.msra.mxu0 0.0
  %250 = vmatprep.subr.mxu0 0.0
  %251 = vmatpush1.xpose.msra.mxu0 0.0
  %252 = vmatprep.subr.mxu0 0.0
  %253 = vmatpush1.xpose.msra.mxu0 0.0
  %254 = vmatprep.subr.mxu0 0.0
  %255 = vmatpush1.xpose.msra.mxu0 0.0
  %256 = vmatprep.subr.mxu0 0.0
  %257 = vmatpush1.xpose.msra.mxu0 0.0
  %258 = vmatprep.subr.mxu0 0.0
  %259 = vmatpush1.xpose.msra.mxu0 0.0
  %260 = vmatprep.subr.mxu0 0.0
  %261 = vmatpush1.xpose.msra.mxu0 0.0
  %262 = vmatprep.subr.mxu0 0.0
  %263 = vmatpush1.xpose.msra.mxu0 0.0
  %264 = vmatprep.subr.mxu0 0.0
  %265 = vmatpush1.xpose.msra.mxu0 0.0
  %266 = vmatprep.subr.mxu0 0.0
  %267 = vmatpush1.xpose.msra.mxu0 0.0
  %268 = vmatprep.subr.mxu0 0.0
  %269 = vmatpush1.xpose.msra.mxu0 0.0
  %270 = vmatprep.subr.mxu0 0.0
  %271 = vmatpush1.xpose.msra.mxu0 0.0
  %272 = vmatprep.subr.mxu0 0.0
  %273 = vmatpush1.xpose.msra.mxu0 0.0
  %274 = vmatprep.subr.mxu0 0.0
  %275 = vmatpush1.xpose.msra.mxu0 0.0
  %276 = vmatprep.subr.mxu0 0.0
  %277 = vmatpush1.xpose.msra.mxu0 0.0
  %278 = vmatprep.subr.mxu0 0.0
  %279 = vmatpush1.xpose.msra.mxu0 0.0
  %280 = vmatprep.subr.mxu0 0.0
  %281 = vmatpush1.xpose.msra.mxu0 0.0
  %282 = vmatprep.subr.mxu0 0.0
  %283 = vmatpush1.xpose.msra.mxu0 0.0
  %284 = vmatprep.subr.mxu0 0.0
  %285 = vmatpush1.xpose.msra.mxu0 0.0
  %286 = vmatprep.subr.mxu0 0.0
  %287 = vmatpush1.xpose.msra.mxu0 0.0
  %288 = vmatprep.subr.mxu0 0.0
  %289 = vmatpush1.xpose.msra.mxu0 0.0
  %290 = vmatprep.subr.mxu0 0.0
  %291 = vmatpush1.xpose.msra.mxu0 0.0
  %292 = vmatprep.subr.mxu0 0.0
  %293 = vmatpush1.xpose.msra.mxu0 0.0
  %294 = vmatprep.subr.mxu0 0.0
  %295 = vmatpush1.xpose.msra.mxu0 0.0
  %296 = vmatprep.subr.mxu0 0.0
  %297 = vmatpush1.xpose.msra.mxu0 0.0
  %298 = vmatprep.subr.mxu0 0.0
  %299 = vmatpush1.xpose.msra.mxu0 0.0
  %300 = vmatprep.subr.mxu0 0.0
  %301 = vmatpush1.xpose.msra.mxu0 0.0
  %302 = vmatprep.subr.mxu0 0.0
  %303 = vmatpush1.xpose.msra.mxu0 0.0
  %304 = vmatprep.mubr.f32.mxu0 0.0
  %305 = vmatmul.mubr.f32.gmra.mrb[0].mxu0 %v232
  %v306 = vpop.f32.mrb[0].mxu0
  %v307 = vadd.f32 %v135, %v306
  %v308 = vpop.f32.mrb[0].mxu0
  %309 = vmatprep.mubr.f32.mxu0 0.0
  %310 = vmatmul.mubr.f32.gmra.mrb[0].mxu0 %v234
  %v311 = vpop.f32.mrb[0].mxu0
  %v312 = vadd.f32 %v137, %v311
  %v313 = vpop.f32.mrb[0].mxu0
  %314 = vdwg.mxu0
  %315 = vrot.lane.b32.xlu0 %v120, 112
  %v316 = vpop.permute.xlu0 %315
  %317 = vrot.lane.b32.xlu0 %v125, 112
  %v318 = vpop.permute.xlu0 %317
  %319 = vrot.lane.b32.xlu0 %v120, 80
  %v320 = vpop.permute.xlu0 %319
  %321 = vrot.lane.b32.xlu0 %v125, 80
  %v322 = vpop.permute.xlu0 %321
  %v323 = vsel %vm140, %v316, 0
  %v325 = vsel %vm140, %v318, 0
  %v327 = vsel %vm140, %v320, 0
  %v329 = vsel %vm140, %v322, 0
  %331 = vmatprep.subr.mxu0 0.0
  %332 = vmatpush1.xpose.msra.mxu0 %v327
  %333 = vmatprep.subr.mxu0 0.0
  %334 = vmatpush1.xpose.msra.mxu0 %v329
  %335 = vmatprep.subr.mxu0 0.0
  %336 = vmatpush1.xpose.msra.mxu0 0.0
  %337 = vmatprep.subr.mxu0 0.0
  %338 = vmatpush1.xpose.msra.mxu0 0.0
  %339 = vmatprep.subr.mxu0 0.0
  %340 = vmatpush1.xpose.msra.mxu0 0.0
  %341 = vmatprep.subr.mxu0 0.0
  %342 = vmatpush1.xpose.msra.mxu0 0.0
  %343 = vmatprep.subr.mxu0 0.0
  %344 = vmatpush1.xpose.msra.mxu0 0.0
  %345 = vmatprep.subr.mxu0 0.0
  %346 = vmatpush1.xpose.msra.mxu0 0.0
  %347 = vmatprep.subr.mxu0 0.0
  %348 = vmatpush1.xpose.msra.mxu0 0.0
  %349 = vmatprep.subr.mxu0 0.0
  %350 = vmatpush1.xpose.msra.mxu0 0.0
  %351 = vmatprep.subr.mxu0 0.0
  %352 = vmatpush1.xpose.msra.mxu0 0.0
  %353 = vmatprep.subr.mxu0 0.0
  %354 = vmatpush1.xpose.msra.mxu0 0.0
  %355 = vmatprep.subr.mxu0 0.0
  %356 = vmatpush1.xpose.msra.mxu0 0.0
  %357 = vmatprep.subr.mxu0 0.0
  %358 = vmatpush1.xpose.msra.mxu0 0.0
  %359 = vmatprep.subr.mxu0 0.0
  %360 = vmatpush1.xpose.msra.mxu0 0.0
  %361 = vmatprep.subr.mxu0 0.0
  %362 = vmatpush1.xpose.msra.mxu0 0.0
  %363 = vmatprep.subr.mxu0 0.0
  %364 = vmatpush1.xpose.msra.mxu0 0.0
  %365 = vmatprep.subr.mxu0 0.0
  %366 = vmatpush1.xpose.msra.mxu0 0.0
  %367 = vmatprep.subr.mxu0 0.0
  %368 = vmatpush1.xpose.msra.mxu0 0.0
  %369 = vmatprep.subr.mxu0 0.0
  %370 = vmatpush1.xpose.msra.mxu0 0.0
  %371 = vmatprep.subr.mxu0 0.0
  %372 = vmatpush1.xpose.msra.mxu0 0.0
  %373 = vmatprep.subr.mxu0 0.0
  %374 = vmatpush1.xpose.msra.mxu0 0.0
  %375 = vmatprep.subr.mxu0 0.0
  %376 = vmatpush1.xpose.msra.mxu0 0.0
  %377 = vmatprep.subr.mxu0 0.0
  %378 = vmatpush1.xpose.msra.mxu0 0.0
  %379 = vmatprep.subr.mxu0 0.0
  %380 = vmatpush1.xpose.msra.mxu0 0.0
  %381 = vmatprep.subr.mxu0 0.0
  %382 = vmatpush1.xpose.msra.mxu0 0.0
  %383 = vmatprep.subr.mxu0 0.0
  %384 = vmatpush1.xpose.msra.mxu0 0.0
  %385 = vmatprep.subr.mxu0 0.0
  %386 = vmatpush1.xpose.msra.mxu0 0.0
  %387 = vmatprep.subr.mxu0 0.0
  %388 = vmatpush1.xpose.msra.mxu0 0.0
  %389 = vmatprep.subr.mxu0 0.0
  %390 = vmatpush1.xpose.msra.mxu0 0.0
  %391 = vmatprep.subr.mxu0 0.0
  %392 = vmatpush1.xpose.msra.mxu0 0.0
  %393 = vmatprep.subr.mxu0 0.0
  %394 = vmatpush1.xpose.msra.mxu0 0.0
  %395 = vmatprep.mubr.f32.mxu0 0.0
  %396 = vmatmul.mubr.f32.gmra.mrb[0].mxu0 %v323
  %v397 = vpop.f32.mrb[0].mxu0
  %v398 = vadd.f32 %v135, %v397
  %v399 = vpop.f32.mrb[0].mxu0
  %400 = vmatprep.mubr.f32.mxu0 0.0
  %401 = vmatmul.mubr.f32.gmra.mrb[0].mxu0 %v325
  %v402 = vpop.f32.mrb[0].mxu0
  %v403 = vadd.f32 %v137, %v402
  %v404 = vpop.f32.mrb[0].mxu0
  %405 = vdwg.mxu0
  %406 = vrot.lane.b32.xlu0 %v120, 104
  %v407 = vpop.permute.xlu0 %406
  %408 = vrot.lane.b32.xlu0 %v125, 104
  %v409 = vpop.permute.xlu0 %408
  %410 = vrot.lane.b32.xlu0 %v120, 72
  %v411 = vpop.permute.xlu0 %410
  %412 = vrot.lane.b32.xlu0 %v125, 72
  %v413 = vpop.permute.xlu0 %412
  %v414 = vsel %vm140, %v407, 0
  %v416 = vsel %vm140, %v409, 0
  %v418 = vsel %vm140, %v411, 0
  %v420 = vsel %vm140, %v413, 0
  %422 = vmatprep.subr.mxu0 0.0
  %423 = vmatpush1.xpose.msra.mxu0 %v418
  %424 = vmatprep.subr.mxu0 0.0
  %425 = vmatpush1.xpose.msra.mxu0 %v420
  %426 = vmatprep.subr.mxu0 0.0
  %427 = vmatpush1.xpose.msra.mxu0 0.0
  %428 = vmatprep.subr.mxu0 0.0
  %429 = vmatpush1.xpose.msra.mxu0 0.0
  %430 = vmatprep.subr.mxu0 0.0
  %431 = vmatpush1.xpose.msra.mxu0 0.0
  %432 = vmatprep.subr.mxu0 0.0
  %433 = vmatpush1.xpose.msra.mxu0 0.0
  %434 = vmatprep.subr.mxu0 0.0
  %435 = vmatpush1.xpose.msra.mxu0 0.0
  %436 = vmatprep.subr.mxu0 0.0
  %437 = vmatpush1.xpose.msra.mxu0 0.0
  %438 = vmatprep.subr.mxu0 0.0
  %439 = vmatpush1.xpose.msra.mxu0 0.0
  %440 = vmatprep.subr.mxu0 0.0
  %441 = vmatpush1.xpose.msra.mxu0 0.0
  %442 = vmatprep.subr.mxu0 0.0
  %443 = vmatpush1.xpose.msra.mxu0 0.0
  %444 = vmatprep.subr.mxu0 0.0
  %445 = vmatpush1.xpose.msra.mxu0 0.0
  %446 = vmatprep.subr.mxu0 0.0
  %447 = vmatpush1.xpose.msra.mxu0 0.0
  %448 = vmatprep.subr.mxu0 0.0
  %449 = vmatpush1.xpose.msra.mxu0 0.0
  %450 = vmatprep.subr.mxu0 0.0
  %451 = vmatpush1.xpose.msra.mxu0 0.0
  %452 = vmatprep.subr.mxu0 0.0
  %453 = vmatpush1.xpose.msra.mxu0 0.0
  %454 = vmatprep.subr.mxu0 0.0
  %455 = vmatpush1.xpose.msra.mxu0 0.0
  %456 = vmatprep.subr.mxu0 0.0
  %457 = vmatpush1.xpose.msra.mxu0 0.0
  %458 = vmatprep.subr.mxu0 0.0
  %459 = vmatpush1.xpose.msra.mxu0 0.0
  %460 = vmatprep.subr.mxu0 0.0
  %461 = vmatpush1.xpose.msra.mxu0 0.0
  %462 = vmatprep.subr.mxu0 0.0
  %463 = vmatpush1.xpose.msra.mxu0 0.0
  %464 = vmatprep.subr.mxu0 0.0
  %465 = vmatpush1.xpose.msra.mxu0 0.0
  %466 = vmatprep.subr.mxu0 0.0
  %467 = vmatpush1.xpose.msra.mxu0 0.0
  %468 = vmatprep.subr.mxu0 0.0
  %469 = vmatpush1.xpose.msra.mxu0 0.0
  %470 = vmatprep.subr.mxu0 0.0
  %471 = vmatpush1.xpose.msra.mxu0 0.0
  %472 = vmatprep.subr.mxu0 0.0
  %473 = vmatpush1.xpose.msra.mxu0 0.0
  %474 = vmatprep.subr.mxu0 0.0
  %475 = vmatpush1.xpose.msra.mxu0 0.0
  %476 = vmatprep.subr.mxu0 0.0
  %477 = vmatpush1.xpose.msra.mxu0 0.0
  %478 = vmatprep.subr.mxu0 0.0
  %479 = vmatpush1.xpose.msra.mxu0 0.0
  %480 = vmatprep.subr.mxu0 0.0
  %481 = vmatpush1.xpose.msra.mxu0 0.0
  %482 = vmatprep.subr.mxu0 0.0
  %483 = vmatpush1.xpose.msra.mxu0 0.0
  %484 = vmatprep.subr.mxu0 0.0
  %485 = vmatpush1.xpose.msra.mxu0 0.0
  %486 = vmatprep.mubr.f32.mxu0 0.0
  %487 = vmatmul.mubr.f32.gmra.mrb[0].mxu0 %v414
  %v488 = vpop.f32.mrb[0].mxu0
  %v489 = vadd.f32 %v135, %v488
  %v490 = vpop.f32.mrb[0].mxu0
  %491 = vmatprep.mubr.f32.mxu0 0.0
  %492 = vmatmul.mubr.f32.gmra.mrb[0].mxu0 %v416
  %v493 = vpop.f32.mrb[0].mxu0
  %v494 = vadd.f32 %v137, %v493
  %v495 = vpop.f32.mrb[0].mxu0
  %496 = vdwg.mxu0
  %vm497 = vcmask 130048
  %v498 = vsel %vm497, %v216, -inf
  %499 = vmax.xlane.f32.xlu0 %v498
  %v500 = vpop.xlane.xlu0 %499
  %v501 = vsel %vm497, %v221, -inf
  %502 = vmax.xlane.f32.xlu0 %v501
  %v503 = vpop.xlane.xlu0 %502
  %v504 = vsub.f32 %v216, %v500
  %v505 = vsub.f32 %v221, %v503
  %v506 = vmul.f32 %v504, 1.442695
  %v507 = vpow.pop %v506
  %v508 = vmul.f32 %v505, 1.442695
  %v509 = vpow.pop %v508
  %v510 = vsel %vm497, %v507, 0.0
  %511 = vadd.xlane.f32.xlu0 %v510
  %v512 = vpop.xlane.xlu0 %511
  %v513 = vsel %vm497, %v509, 0.0
  %514 = vadd.xlane.f32.xlu0 %v513
  %v515 = vpop.xlane.xlu0 %514
  %v516 = vrcp.pop %v512
  %v517 = vrcp.pop %v515
  %v518 = vmul.f32 %v507, %v516
  %v519 = vmul.f32 %v509, %v517
  %v520 = vsel %vm497, %v307, -inf
  %521 = vmax.xlane.f32.xlu0 %v520
  %v522 = vpop.xlane.xlu0 %521
  %v523 = vsel %vm497, %v312, -inf
  %524 = vmax.xlane.f32.xlu0 %v523
  %v525 = vpop.xlane.xlu0 %524
  %v526 = vsub.f32 %v307, %v522
  %v527 = vsub.f32 %v312, %v525
  %v528 = vmul.f32 %v526, 1.442695
  %v529 = vpow.pop %v528
  %v530 = vmul.f32 %v527, 1.442695
  %v531 = vpow.pop %v530
  %v532 = vsel %vm497, %v529, 0.0
  %533 = vadd.xlane.f32.xlu0 %v532
  %v534 = vpop.xlane.xlu0 %533
  %v535 = vsel %vm497, %v531, 0.0
  %536 = vadd.xlane.f32.xlu0 %v535
  %v537 = vpop.xlane.xlu0 %536
  %v538 = vrcp.pop %v534
  %v539 = vrcp.pop %v537
  %v540 = vmul.f32 %v529, %v538
  %v541 = vmul.f32 %v531, %v539
  %v542 = vsel %vm497, %v398, -inf
  %543 = vmax.xlane.f32.xlu0 %v542
  %v544 = vpop.xlane.xlu0 %543
  %v545 = vsel %vm497, %v403, -inf
  %546 = vmax.xlane.f32.xlu0 %v545
  %v547 = vpop.xlane.xlu0 %546
  %v548 = vsub.f32 %v398, %v544
  %v549 = vsub.f32 %v403, %v547
  %v550 = vmul.f32 %v548, 1.442695
  %v551 = vpow.pop %v550
  %v552 = vmul.f32 %v549, 1.442695
  %v553 = vpow.pop %v552
  %v554 = vsel %vm497, %v551, 0.0
  %555 = vadd.xlane.f32.xlu0 %v554
  %v556 = vpop.xlane.xlu0 %555
  %v557 = vsel %vm497, %v553, 0.0
  %558 = vadd.xlane.f32.xlu0 %v557
  %v559 = vpop.xlane.xlu0 %558
  %v560 = vrcp.pop %v556
  %v561 = vrcp.pop %v559
  %v562 = vmul.f32 %v551, %v560
  %v563 = vmul.f32 %v553, %v561
  %v564 = vsel %vm497, %v489, -inf
  %565 = vmax.xlane.f32.xlu0 %v564
  %v566 = vpop.xlane.xlu0 %565
  %v567 = vsel %vm497, %v494, -inf
  %568 = vmax.xlane.f32.xlu0 %v567
  %v569 = vpop.xlane.xlu0 %568
  %v570 = vsub.f32 %v489, %v566
  %v571 = vsub.f32 %v494, %v569
  %v572 = vmul.f32 %v570, 1.442695
  %v573 = vpow.pop %v572
  %v574 = vmul.f32 %v571, 1.442695
  %v575 = vpow.pop %v574
  %v576 = vsel %vm497, %v573, 0.0
  %577 = vadd.xlane.f32.xlu0 %v576
  %v578 = vpop.xlane.xlu0 %577
  %v579 = vsel %vm497, %v575, 0.0
  %580 = vadd.xlane.f32.xlu0 %v579
  %v581 = vpop.xlane.xlu0 %580
  %v582 = vrcp.pop %v578
  %v583 = vrcp.pop %v581
  %v584 = vmul.f32 %v573, %v582
  %v585 = vmul.f32 %v575, %v583
  %586 = vrot.lane.b32.xlu0 %v120, 64
  %v587 = vpop.permute.xlu0 %586
  %588 = vrot.lane.b32.xlu0 %v125, 64
  %v589 = vpop.permute.xlu0 %588
  %v593 = vsel %vm497, %v518, 0
  %v596 = vsel %vm497, %v519, 0
  %598 = vmatprep.subr.mxu0 0.0
  %599 = vmatpush1.msra.mxu0 %v587
  %600 = vmatprep.subr.mxu0 0.0
  %601 = vmatpush1.msra.mxu0 %v589
  %602 = vmatprep.subr.mxu0 0.0
  %603 = vmatpush1.msra.mxu0 0.0
  %604 = vmatprep.subr.mxu0 0.0
  %605 = vmatpush1.msra.mxu0 0.0
  %606 = vmatprep.subr.mxu0 0.0
  %607 = vmatpush1.msra.mxu0 0.0
  %608 = vmatprep.subr.mxu0 0.0
  %609 = vmatpush1.msra.mxu0 0.0
  %610 = vmatprep.subr.mxu0 0.0
  %611 = vmatpush1.msra.mxu0 0.0
  %612 = vmatprep.subr.mxu0 0.0
  %613 = vmatpush1.msra.mxu0 0.0
  %614 = vmatprep.subr.mxu0 0.0
  %615 = vmatpush1.msra.mxu0 0.0
  %616 = vmatprep.subr.mxu0 0.0
  %617 = vmatpush1.msra.mxu0 0.0
  %618 = vmatprep.subr.mxu0 0.0
  %619 = vmatpush1.msra.mxu0 0.0
  %620 = vmatprep.subr.mxu0 0.0
  %621 = vmatpush1.msra.mxu0 0.0
  %622 = vmatprep.subr.mxu0 0.0
  %623 = vmatpush1.msra.mxu0 0.0
  %624 = vmatprep.subr.mxu0 0.0
  %625 = vmatpush1.msra.mxu0 0.0
  %626 = vmatprep.subr.mxu0 0.0
  %627 = vmatpush1.msra.mxu0 0.0
  %628 = vmatprep.subr.mxu0 0.0
  %629 = vmatpush1.msra.mxu0 0.0
  %630 = vmatprep.subr.mxu0 0.0
  %631 = vmatpush1.msra.mxu0 0.0
  %632 = vmatprep.subr.mxu0 0.0
  %633 = vmatpush1.msra.mxu0 0.0
  %634 = vmatprep.subr.mxu0 0.0
  %635 = vmatpush1.msra.mxu0 0.0
  %636 = vmatprep.subr.mxu0 0.0
  %637 = vmatpush1.msra.mxu0 0.0
  %638 = vmatprep.subr.mxu0 0.0
  %639 = vmatpush1.msra.mxu0 0.0
  %640 = vmatprep.subr.mxu0 0.0
  %641 = vmatpush1.msra.mxu0 0.0
  %642 = vmatprep.subr.mxu0 0.0
  %643 = vmatpush1.msra.mxu0 0.0
  %644 = vmatprep.subr.mxu0 0.0
  %645 = vmatpush1.msra.mxu0 0.0
  %646 = vmatprep.subr.mxu0 0.0
  %647 = vmatpush1.msra.mxu0 0.0
  %648 = vmatprep.subr.mxu0 0.0
  %649 = vmatpush1.msra.mxu0 0.0
  %650 = vmatprep.subr.mxu0 0.0
  %651 = vmatpush1.msra.mxu0 0.0
  %652 = vmatprep.subr.mxu0 0.0
  %653 = vmatpush1.msra.mxu0 0.0
  %654 = vmatprep.subr.mxu0 0.0
  %655 = vmatpush1.msra.mxu0 0.0
  %656 = vmatprep.subr.mxu0 0.0
  %657 = vmatpush1.msra.mxu0 0.0
  %658 = vmatprep.subr.mxu0 0.0
  %659 = vmatpush1.msra.mxu0 0.0
  %660 = vmatprep.subr.mxu0 0.0
  %661 = vmatpush1.msra.mxu0 0.0
  %662 = vmatprep.mubr.f32.mxu0 0.0
  %663 = vmatmul.mubr.f32.gmra.mrb[0].mxu0 %v593
  %v664 = vpop.f32.mrb[0].mxu0
  %v665 = vadd.f32 0.0, %v664
  %v666 = vpop.f32.mrb[0].mxu0
  %667 = vmatprep.mubr.f32.mxu0 0.0
  %668 = vmatmul.mubr.f32.gmra.mrb[0].mxu0 %v596
  %v669 = vpop.f32.mrb[0].mxu0
  %v670 = vadd.f32 0.0, %v669
  %v671 = vpop.f32.mrb[0].mxu0
  %672 = vdwg.mxu0
  %673 = vrot.lane.b32.xlu0 %v120, 56
  %v674 = vpop.permute.xlu0 %673
  %675 = vrot.lane.b32.xlu0 %v125, 56
  %v676 = vpop.permute.xlu0 %675
  %v680 = vsel %vm497, %v540, 0
  %v683 = vsel %vm497, %v541, 0
  %685 = vmatprep.subr.mxu0 0.0
  %686 = vmatpush1.msra.mxu0 %v674
  %687 = vmatprep.subr.mxu0 0.0
  %688 = vmatpush1.msra.mxu0 %v676
  %689 = vmatprep.subr.mxu0 0.0
  %690 = vmatpush1.msra.mxu0 0.0
  %691 = vmatprep.subr.mxu0 0.0
  %692 = vmatpush1.msra.mxu0 0.0
  %693 = vmatprep.subr.mxu0 0.0
  %694 = vmatpush1.msra.mxu0 0.0
  %695 = vmatprep.subr.mxu0 0.0
  %696 = vmatpush1.msra.mxu0 0.0
  %697 = vmatprep.subr.mxu0 0.0
  %698 = vmatpush1.msra.mxu0 0.0
  %699 = vmatprep.subr.mxu0 0.0
  %700 = vmatpush1.msra.mxu0 0.0
  %701 = vmatprep.subr.mxu0 0.0
  %702 = vmatpush1.msra.mxu0 0.0
  %703 = vmatprep.subr.mxu0 0.0
  %704 = vmatpush1.msra.mxu0 0.0
  %705 = vmatprep.subr.mxu0 0.0
  %706 = vmatpush1.msra.mxu0 0.0
  %707 = vmatprep.subr.mxu0 0.0
  %708 = vmatpush1.msra.mxu0 0.0
  %709 = vmatprep.subr.mxu0 0.0
  %710 = vmatpush1.msra.mxu0 0.0
  %711 = vmatprep.subr.mxu0 0.0
  %712 = vmatpush1.msra.mxu0 0.0
  %713 = vmatprep.subr.mxu0 0.0
  %714 = vmatpush1.msra.mxu0 0.0
  %715 = vmatprep.subr.mxu0 0.0
  %716 = vmatpush1.msra.mxu0 0.0
  %717 = vmatprep.subr.mxu0 0.0
  %718 = vmatpush1.msra.mxu0 0.0
  %719 = vmatprep.subr.mxu0 0.0
  %720 = vmatpush1.msra.mxu0 0.0
  %721 = vmatprep.subr.mxu0 0.0
  %722 = vmatpush1.msra.mxu0 0.0
  %723 = vmatprep.subr.mxu0 0.0
  %724 = vmatpush1.msra.mxu0 0.0
  %725 = vmatprep.subr.mxu0 0.0
  %726 = vmatpush1.msra.mxu0 0.0
  %727 = vmatprep.subr.mxu0 0.0
  %728 = vmatpush1.msra.mxu0 0.0
  %729 = vmatprep.subr.mxu0 0.0
  %730 = vmatpush1.msra.mxu0 0.0
  %731 = vmatprep.subr.mxu0 0.0
  %732 = vmatpush1.msra.mxu0 0.0
  %733 = vmatprep.subr.mxu0 0.0
  %734 = vmatpush1.msra.mxu0 0.0
  %735 = vmatprep.subr.mxu0 0.0
  %736 = vmatpush1.msra.mxu0 0.0
  %737 = vmatprep.subr.mxu0 0.0
  %738 = vmatpush1.msra.mxu0 0.0
  %739 = vmatprep.subr.mxu0 0.0
  %740 = vmatpush1.msra.mxu0 0.0
  %741 = vmatprep.subr.mxu0 0.0
  %742 = vmatpush1.msra.mxu0 0.0
  %743 = vmatprep.subr.mxu0 0.0
  %744 = vmatpush1.msra.mxu0 0.0
  %745 = vmatprep.subr.mxu0 0.0
  %746 = vmatpush1.msra.mxu0 0.0
  %747 = vmatprep.subr.mxu0 0.0
  %748 = vmatpush1.msra.mxu0 0.0
  %749 = vmatprep.mubr.f32.mxu0 0.0
  %750 = vmatmul.mubr.f32.gmra.mrb[0].mxu0 %v680
  %v751 = vpop.f32.mrb[0].mxu0
  %v752 = vadd.f32 0.0, %v751
  %v753 = vpop.f32.mrb[0].mxu0
  %754 = vmatprep.mubr.f32.mxu0 0.0
  %755 = vmatmul.mubr.f32.gmra.mrb[0].mxu0 %v683
  %v756 = vpop.f32.mrb[0].mxu0
  %v757 = vadd.f32 0.0, %v756
  %v758 = vpop.f32.mrb[0].mxu0
  %759 = vdwg.mxu0
  %760 = vrot.lane.b32.xlu0 %v120, 48
  %v761 = vpop.permute.xlu0 %760
  %762 = vrot.lane.b32.xlu0 %v125, 48
  %v763 = vpop.permute.xlu0 %762
  %v767 = vsel %vm497, %v562, 0
  %v770 = vsel %vm497, %v563, 0
  %772 = vmatprep.subr.mxu0 0.0
  %773 = vmatpush1.msra.mxu0 %v761
  %774 = vmatprep.subr.mxu0 0.0
  %775 = vmatpush1.msra.mxu0 %v763
  %776 = vmatprep.subr.mxu0 0.0
  %777 = vmatpush1.msra.mxu0 0.0
  %778 = vmatprep.subr.mxu0 0.0
  %779 = vmatpush1.msra.mxu0 0.0
  %780 = vmatprep.subr.mxu0 0.0
  %781 = vmatpush1.msra.mxu0 0.0
  %782 = vmatprep.subr.mxu0 0.0
  %783 = vmatpush1.msra.mxu0 0.0
  %784 = vmatprep.subr.mxu0 0.0
  %785 = vmatpush1.msra.mxu0 0.0
  %786 = vmatprep.subr.mxu0 0.0
  %787 = vmatpush1.msra.mxu0 0.0
  %788 = vmatprep.subr.mxu0 0.0
  %789 = vmatpush1.msra.mxu0 0.0
  %790 = vmatprep.subr.mxu0 0.0
  %791 = vmatpush1.msra.mxu0 0.0
  %792 = vmatprep.subr.mxu0 0.0
  %793 = vmatpush1.msra.mxu0 0.0
  %794 = vmatprep.subr.mxu0 0.0
  %795 = vmatpush1.msra.mxu0 0.0
  %796 = vmatprep.subr.mxu0 0.0
  %797 = vmatpush1.msra.mxu0 0.0
  %798 = vmatprep.subr.mxu0 0.0
  %799 = vmatpush1.msra.mxu0 0.0
  %800 = vmatprep.subr.mxu0 0.0
  %801 = vmatpush1.msra.mxu0 0.0
  %802 = vmatprep.subr.mxu0 0.0
  %803 = vmatpush1.msra.mxu0 0.0
  %804 = vmatprep.subr.mxu0 0.0
  %805 = vmatpush1.msra.mxu0 0.0
  %806 = vmatprep.subr.mxu0 0.0
  %807 = vmatpush1.msra.mxu0 0.0
  %808 = vmatprep.subr.mxu0 0.0
  %809 = vmatpush1.msra.mxu0 0.0
  %810 = vmatprep.subr.mxu0 0.0
  %811 = vmatpush1.msra.mxu0 0.0
  %812 = vmatprep.subr.mxu0 0.0
  %813 = vmatpush1.msra.mxu0 0.0
  %814 = vmatprep.subr.mxu0 0.0
  %815 = vmatpush1.msra.mxu0 0.0
  %816 = vmatprep.subr.mxu0 0.0
  %817 = vmatpush1.msra.mxu0 0.0
  %818 = vmatprep.subr.mxu0 0.0
  %819 = vmatpush1.msra.mxu0 0.0
  %820 = vmatprep.subr.mxu0 0.0
  %821 = vmatpush1.msra.mxu0 0.0
  %822 = vmatprep.subr.mxu0 0.0
  %823 = vmatpush1.msra.mxu0 0.0
  %824 = vmatprep.subr.mxu0 0.0
  %825 = vmatpush1.msra.mxu0 0.0
  %826 = vmatprep.subr.mxu0 0.0
  %827 = vmatpush1.msra.mxu0 0.0
  %828 = vmatprep.subr.mxu0 0.0
  %829 = vmatpush1.msra.mxu0 0.0
  %830 = vmatprep.subr.mxu0 0.0
  %831 = vmatpush1.msra.mxu0 0.0
  %832 = vmatprep.subr.mxu0 0.0
  %833 = vmatpush1.msra.mxu0 0.0
  %834 = vmatprep.subr.mxu0 0.0
  %835 = vmatpush1.msra.mxu0 0.0
  %836 = vmatprep.mubr.f32.mxu0 0.0
  %837 = vmatmul.mubr.f32.gmra.mrb[0].mxu0 %v767
  %v838 = vpop.f32.mrb[0].mxu0
  %v839 = vadd.f32 0.0, %v838
  %v840 = vpop.f32.mrb[0].mxu0
  %841 = vmatprep.mubr.f32.mxu0 0.0
  %842 = vmatmul.mubr.f32.gmra.mrb[0].mxu0 %v770
  %v843 = vpop.f32.mrb[0].mxu0
  %v844 = vadd.f32 0.0, %v843
  %v845 = vpop.f32.mrb[0].mxu0
  %846 = vdwg.mxu0
  %847 = vrot.lane.b32.xlu0 %v120, 40
  %v848 = vpop.permute.xlu0 %847
  %849 = vrot.lane.b32.xlu0 %v125, 40
  %v850 = vpop.permute.xlu0 %849
  %v854 = vsel %vm497, %v584, 0
  %v857 = vsel %vm497, %v585, 0
  %859 = vmatprep.subr.mxu0 0.0
  %860 = vmatpush1.msra.mxu0 %v848
  %861 = vmatprep.subr.mxu0 0.0
  %862 = vmatpush1.msra.mxu0 %v850
  %863 = vmatprep.subr.mxu0 0.0
  %864 = vmatpush1.msra.mxu0 0.0
  %865 = vmatprep.subr.mxu0 0.0
  %866 = vmatpush1.msra.mxu0 0.0
  %867 = vmatprep.subr.mxu0 0.0
  %868 = vmatpush1.msra.mxu0 0.0
  %869 = vmatprep.subr.mxu0 0.0
  %870 = vmatpush1.msra.mxu0 0.0
  %871 = vmatprep.subr.mxu0 0.0
  %872 = vmatpush1.msra.mxu0 0.0
  %873 = vmatprep.subr.mxu0 0.0
  %874 = vmatpush1.msra.mxu0 0.0
  %875 = vmatprep.subr.mxu0 0.0
  %876 = vmatpush1.msra.mxu0 0.0
  %877 = vmatprep.subr.mxu0 0.0
  %878 = vmatpush1.msra.mxu0 0.0
  %879 = vmatprep.subr.mxu0 0.0
  %880 = vmatpush1.msra.mxu0 0.0
  %881 = vmatprep.subr.mxu0 0.0
  %882 = vmatpush1.msra.mxu0 0.0
  %883 = vmatprep.subr.mxu0 0.0
  %884 = vmatpush1.msra.mxu0 0.0
  %885 = vmatprep.subr.mxu0 0.0
  %886 = vmatpush1.msra.mxu0 0.0
  %887 = vmatprep.subr.mxu0 0.0
  %888 = vmatpush1.msra.mxu0 0.0
  %889 = vmatprep.subr.mxu0 0.0
  %890 = vmatpush1.msra.mxu0 0.0
  %891 = vmatprep.subr.mxu0 0.0
  %892 = vmatpush1.msra.mxu0 0.0
  %893 = vmatprep.subr.mxu0 0.0
  %894 = vmatpush1.msra.mxu0 0.0
  %895 = vmatprep.subr.mxu0 0.0
  %896 = vmatpush1.msra.mxu0 0.0
  %897 = vmatprep.subr.mxu0 0.0
  %898 = vmatpush1.msra.mxu0 0.0
  %899 = vmatprep.subr.mxu0 0.0
  %900 = vmatpush1.msra.mxu0 0.0
  %901 = vmatprep.subr.mxu0 0.0
  %902 = vmatpush1.msra.mxu0 0.0
  %903 = vmatprep.subr.mxu0 0.0
  %904 = vmatpush1.msra.mxu0 0.0
  %905 = vmatprep.subr.mxu0 0.0
  %906 = vmatpush1.msra.mxu0 0.0
  %907 = vmatprep.subr.mxu0 0.0
  %908 = vmatpush1.msra.mxu0 0.0
  %909 = vmatprep.subr.mxu0 0.0
  %910 = vmatpush1.msra.mxu0 0.0
  %911 = vmatprep.subr.mxu0 0.0
  %912 = vmatpush1.msra.mxu0 0.0
  %913 = vmatprep.subr.mxu0 0.0
  %914 = vmatpush1.msra.mxu0 0.0
  %915 = vmatprep.subr.mxu0 0.0
  %916 = vmatpush1.msra.mxu0 0.0
  %917 = vmatprep.subr.mxu0 0.0
  %918 = vmatpush1.msra.mxu0 0.0
  %919 = vmatprep.subr.mxu0 0.0
  %920 = vmatpush1.msra.mxu0 0.0
  %921 = vmatprep.subr.mxu0 0.0
  %922 = vmatpush1.msra.mxu0 0.0
  %923 = vmatprep.mubr.f32.mxu0 0.0
  %924 = vmatmul.mubr.f32.gmra.mrb[0].mxu0 %v854
  %v925 = vpop.f32.mrb[0].mxu0
  %v926 = vadd.f32 0.0, %v925
  %v927 = vpop.f32.mrb[0].mxu0
  %928 = vmatprep.mubr.f32.mxu0 0.0
  %929 = vmatmul.mubr.f32.gmra.mrb[0].mxu0 %v857
  %v930 = vpop.f32.mrb[0].mxu0
  %v931 = vadd.f32 0.0, %v930
  %v932 = vpop.f32.mrb[0].mxu0
  %933 = vdwg.mxu0
  %936 = vrot.lane.b32.xlu0 %v752, 8
  %v937 = vpop.permute.xlu0 %936
  %938 = vrot.lane.b32.xlu0 %v757, 8
  %v939 = vpop.permute.xlu0 %938
  %944 = vrot.lane.b32.xlu0 %v839, 16
  %v945 = vpop.permute.xlu0 %944
  %946 = vrot.lane.b32.xlu0 %v844, 16
  %v947 = vpop.permute.xlu0 %946
  %952 = vrot.lane.b32.xlu0 %v926, 24
  %v953 = vpop.permute.xlu0 %952
  %954 = vrot.lane.b32.xlu0 %v931, 24
  %v955 = vpop.permute.xlu0 %954
  %v958 = vsel %vm140, %v665, %v937
  %v959 = vsel %vm140, %v670, %v939
  %v960 = vsel %vm497, %v958, %v945
  %v961 = vsel %vm497, %v959, %v947
  %vm962 = vcmask 195584
  %v963 = vsel %vm962, %v960, %v953
  %v964 = vsel %vm962, %v961, %v955
  %v965 = vlaneseq
  %v966 = vshrl.u32 %v965, 7
  %v967 = vsub.s32 0, %v966
  %v968 = vrot.slane %v30, %v967
  %973 = vrot.lane.b32.xlu0 %v16, 32
  %v974 = vpop.permute.xlu0 %973
  %975 = vrot.lane.b32.xlu0 %v17, 32
  %v976 = vpop.permute.xlu0 %975
  %977 = vrot.lane.b32.xlu0 %v18, 32
  %v978 = vpop.permute.xlu0 %977
  %979 = vrot.lane.b32.xlu0 %v19, 32
  %v980 = vpop.permute.xlu0 %979
  %v986 = vsel %vm46, %v963, 0
  %v989 = vsel %vm46, %v964, 0
  %991 = vmatprep.subr.mxu0 0.0
  %992 = vmatpush1.msra.mxu0 %v974
  %993 = vmatprep.subr.mxu0 0.0
  %994 = vmatpush1.msra.mxu0 %v976
  %995 = vmatprep.subr.mxu0 0.0
  %996 = vmatpush1.msra.mxu0 %v978
  %997 = vmatprep.subr.mxu0 0.0
  %998 = vmatpush1.msra.mxu0 %v980
  %999 = vmatprep.subr.mxu0 0.0
  %1000 = vmatpush1.msra.mxu0 0.0
  %1001 = vmatprep.subr.mxu0 0.0
  %1002 = vmatpush1.msra.mxu0 0.0
  %1003 = vmatprep.subr.mxu0 0.0
  %1004 = vmatpush1.msra.mxu0 0.0
  %1005 = vmatprep.subr.mxu0 0.0
  %1006 = vmatpush1.msra.mxu0 0.0
  %1007 = vmatprep.subr.mxu0 0.0
  %1008 = vmatpush1.msra.mxu0 0.0
  %1009 = vmatprep.subr.mxu0 0.0
  %1010 = vmatpush1.msra.mxu0 0.0
  %1011 = vmatprep.subr.mxu0 0.0
  %1012 = vmatpush1.msra.mxu0 0.0
  %1013 = vmatprep.subr.mxu0 0.0
  %1014 = vmatpush1.msra.mxu0 0.0
  %1015 = vmatprep.subr.mxu0 0.0
  %1016 = vmatpush1.msra.mxu0 0.0
  %1017 = vmatprep.subr.mxu0 0.0
  %1018 = vmatpush1.msra.mxu0 0.0
  %1019 = vmatprep.subr.mxu0 0.0
  %1020 = vmatpush1.msra.mxu0 0.0
  %1021 = vmatprep.subr.mxu0 0.0
  %1022 = vmatpush1.msra.mxu0 0.0
  %1023 = vmatprep.subr.mxu0 0.0
  %1024 = vmatpush1.msra.mxu0 0.0
  %1025 = vmatprep.subr.mxu0 0.0
  %1026 = vmatpush1.msra.mxu0 0.0
  %1027 = vmatprep.subr.mxu0 0.0
  %1028 = vmatpush1.msra.mxu0 0.0
  %1029 = vmatprep.subr.mxu0 0.0
  %1030 = vmatpush1.msra.mxu0 0.0
  %1031 = vmatprep.subr.mxu0 0.0
  %1032 = vmatpush1.msra.mxu0 0.0
  %1033 = vmatprep.subr.mxu0 0.0
  %1034 = vmatpush1.msra.mxu0 0.0
  %1035 = vmatprep.subr.mxu0 0.0
  %1036 = vmatpush1.msra.mxu0 0.0
  %1037 = vmatprep.subr.mxu0 0.0
  %1038 = vmatpush1.msra.mxu0 0.0
  %1039 = vmatprep.subr.mxu0 0.0
  %1040 = vmatpush1.msra.mxu0 0.0
  %1041 = vmatprep.subr.mxu0 0.0
  %1042 = vmatpush1.msra.mxu0 0.0
  %1043 = vmatprep.subr.mxu0 0.0
  %1044 = vmatpush1.msra.mxu0 0.0
  %1045 = vmatprep.subr.mxu0 0.0
  %1046 = vmatpush1.msra.mxu0 0.0
  %1047 = vmatprep.subr.mxu0 0.0
  %1048 = vmatpush1.msra.mxu0 0.0
  %1049 = vmatprep.subr.mxu0 0.0
  %1050 = vmatpush1.msra.mxu0 0.0
  %1051 = vmatprep.subr.mxu0 0.0
  %1052 = vmatpush1.msra.mxu0 0.0
  %1053 = vmatprep.subr.mxu0 0.0
  %1054 = vmatpush1.msra.mxu0 0.0
  %1055 = vmatprep.mubr.f32.mxu0 0.0
  %1056 = vmatmul.mubr.f32.gmra.mrb[0].mxu0 %v986
  %v1057 = vpop.f32.mrb[0].mxu0
  %v1058 = vadd.f32 %v968, %v1057
  %v1059 = vpop.f32.mrb[0].mxu0
  %1060 = vmatprep.mubr.f32.mxu0 0.0
  %1061 = vmatmul.mubr.f32.gmra.mrb[0].mxu0 %v989
  %v1062 = vpop.f32.mrb[0].mxu0
  %v1063 = vadd.f32 %v968, %v1062
  %v1064 = vpop.f32.mrb[0].mxu0
  %1065 = vdwg.mxu0
  %v1066 = vadd.f32 %v14, %v1058
  %v1067 = vadd.f32 %v15, %v1063
  %v1068 = vsel %vm46, %v1066, 0.0
  %1069 = vadd.xlane.f32.xlu0 %v1068
  %v1070 = vpop.xlane.xlu0 %1069
  %v1071 = vsel %vm46, %v1067, 0.0
  %1072 = vadd.xlane.f32.xlu0 %v1071
  %v1073 = vpop.xlane.xlu0 %1072
  %v1074 = vrcp.pop 32.0
  %v1075 = vmul.f32 %v1070, %v1074
  %v1076 = vmul.f32 %v1073, %v1074
  %v1077 = vsub.f32 %v1066, %v1075
  %v1078 = vsub.f32 %v1067, %v1076
  %v1079 = vmul.f32 %v1077, %v1077
  %v1080 = vmul.f32 %v1078, %v1078
  %v1081 = vsel %vm46, %v1079, 0.0
  %1082 = vadd.xlane.f32.xlu0 %v1081
  %v1083 = vpop.xlane.xlu0 %1082
  %v1084 = vsel %vm46, %v1080, 0.0
  %1085 = vadd.xlane.f32.xlu0 %v1084
  %v1086 = vpop.xlane.xlu0 %1085
  %v1087 = vmul.f32 %v1083, %v1074
  %v1088 = vmul.f32 %v1086, %v1074
  %v1089 = vadd.f32 %v1087, 1e-05
  %v1090 = vadd.f32 %v1088, 1e-05
  %v1091 = vrsqrt.pop %v1089
  %v1092 = vrsqrt.pop %v1090
  %v1093 = vmul.f32 %v1077, %v1091
  %v1094 = vmul.f32 %v1078, %v1092
  %v1095 = vlaneseq
  %v1096 = vshrl.u32 %v1095, 7
  %v1097 = vsub.s32 0, %v1096
  %v1098 = vrot.slane %v31, %v1097
  %v1099 = vmul.f32 %v1093, %v1098
  %v1100 = vmul.f32 %v1094, %v1098
  %1102 = vrot.lane.b32.xlu0 %v1098, 96
  %v1103 = vpop.permute.xlu0 %1102
  %v1105 = vadd.f32 %v1099, %v1103
  %v1106 = vadd.f32 %v1100, %v1103
  %v1107 = vlaneseq
  %v1108 = vshrl.u32 %v1107, 7
  %v1109 = vsub.s32 0, %v1108
  %v1110 = vrot.slane %v29, %v1109
  %v1112 = vsel %vm46, %v1105, 0
  %v1115 = vsel %vm46, %v1106, 0
  %1117 = vmatprep.subr.mxu0 0.0
  %1118 = vmatpush1.msra.mxu0 %v20
  %1119 = vmatprep.subr.mxu0 0.0
  %1120 = vmatpush1.msra.mxu0 %v21
  %1121 = vmatprep.subr.mxu0 0.0
  %1122 = vmatpush1.msra.mxu0 %v22
  %1123 = vmatprep.subr.mxu0 0.0
  %1124 = vmatpush1.msra.mxu0 %v23
  %1125 = vmatprep.subr.mxu0 0.0
  %1126 = vmatpush1.msra.mxu0 0.0
  %1127 = vmatprep.subr.mxu0 0.0
  %1128 = vmatpush1.msra.mxu0 0.0
  %1129 = vmatprep.subr.mxu0 0.0
  %1130 = vmatpush1.msra.mxu0 0.0
  %1131 = vmatprep.subr.mxu0 0.0
  %1132 = vmatpush1.msra.mxu0 0.0
  %1133 = vmatprep.subr.mxu0 0.0
  %1134 = vmatpush1.msra.mxu0 0.0
  %1135 = vmatprep.subr.mxu0 0.0
  %1136 = vmatpush1.msra.mxu0 0.0
  %1137 = vmatprep.subr.mxu0 0.0
  %1138 = vmatpush1.msra.mxu0 0.0
  %1139 = vmatprep.subr.mxu0 0.0
  %1140 = vmatpush1.msra.mxu0 0.0
  %1141 = vmatprep.subr.mxu0 0.0
  %1142 = vmatpush1.msra.mxu0 0.0
  %1143 = vmatprep.subr.mxu0 0.0
  %1144 = vmatpush1.msra.mxu0 0.0
  %1145 = vmatprep.subr.mxu0 0.0
  %1146 = vmatpush1.msra.mxu0 0.0
  %1147 = vmatprep.subr.mxu0 0.0
  %1148 = vmatpush1.msra.mxu0 0.0
  %1149 = vmatprep.subr.mxu0 0.0
  %1150 = vmatpush1.msra.mxu0 0.0
  %1151 = vmatprep.subr.mxu0 0.0
  %1152 = vmatpush1.msra.mxu0 0.0
  %1153 = vmatprep.subr.mxu0 0.0
  %1154 = vmatpush1.msra.mxu0 0.0
  %1155 = vmatprep.subr.mxu0 0.0
  %1156 = vmatpush1.msra.mxu0 0.0
  %1157 = vmatprep.subr.mxu0 0.0
  %1158 = vmatpush1.msra.mxu0 0.0
  %1159 = vmatprep.subr.mxu0 0.0
  %1160 = vmatpush1.msra.mxu0 0.0
  %1161 = vmatprep.subr.mxu0 0.0
  %1162 = vmatpush1.msra.mxu0 0.0
  %1163 = vmatprep.subr.mxu0 0.0
  %1164 = vmatpush1.msra.mxu0 0.0
  %1165 = vmatprep.subr.mxu0 0.0
  %1166 = vmatpush1.msra.mxu0 0.0
  %1167 = vmatprep.subr.mxu0 0.0
  %1168 = vmatpush1.msra.mxu0 0.0
  %1169 = vmatprep.subr.mxu0 0.0
  %1170 = vmatpush1.msra.mxu0 0.0
  %1171 = vmatprep.subr.mxu0 0.0
  %1172 = vmatpush1.msra.mxu0 0.0
  %1173 = vmatprep.subr.mxu0 0.0
  %1174 = vmatpush1.msra.mxu0 0.0
  %1175 = vmatprep.subr.mxu0 0.0
  %1176 = vmatpush1.msra.mxu0 0.0
  %1177 = vmatprep.subr.mxu0 0.0
  %1178 = vmatpush1.msra.mxu0 0.0
  %1179 = vmatprep.subr.mxu0 0.0
  %1180 = vmatpush1.msra.mxu0 0.0
  %1181 = vmatprep.mubr.f32.mxu0 0.0
  %1182 = vmatmul.mubr.f32.gmra.mrb[0].mxu0 %v1112
  %v1183 = vpop.f32.mrb[0].mxu0
  %v1184 = vadd.f32 %v1110, %v1183
  %v1185 = vpop.f32.mrb[0].mxu0
  %1186 = vmatprep.mubr.f32.mxu0 0.0
  %1187 = vmatmul.mubr.f32.gmra.mrb[0].mxu0 %v1115
  %v1188 = vpop.f32.mrb[0].mxu0
  %v1189 = vadd.f32 %v1110, %v1188
  %v1190 = vpop.f32.mrb[0].mxu0
  %1191 = vdwg.mxu0
  %1192 = vrot.lane.b32.xlu0 %v14, 96
  %v1193 = vpop.permute.xlu0 %1192
  %1194 = vrot.lane.b32.xlu0 %v15, 96
  %v1195 = vpop.permute.xlu0 %1194
  %1200 = vrot.lane.b32.xlu0 %v20, 96
  %v1201 = vpop.permute.xlu0 %1200
  %1202 = vrot.lane.b32.xlu0 %v21, 96
  %v1203 = vpop.permute.xlu0 %1202
  %1204 = vrot.lane.b32.xlu0 %v22, 96
  %v1205 = vpop.permute.xlu0 %1204
  %1206 = vrot.lane.b32.xlu0 %v23, 96
  %v1207 = vpop.permute.xlu0 %1206
  %1213 = vrot.lane.b32.xlu0 %v1110, 96
  %v1214 = vpop.permute.xlu0 %1213
  %v1216 = vsel %vm46, %v1193, 0
  %v1218 = vsel %vm46, %v1195, 0
  %1220 = vmatprep.subr.mxu0 0.0
  %1221 = vmatpush1.msra.mxu0 %v1201
  %1222 = vmatprep.subr.mxu0 0.0
  %1223 = vmatpush1.msra.mxu0 %v1203
  %1224 = vmatprep.subr.mxu0 0.0
  %1225 = vmatpush1.msra.mxu0 %v1205
  %1226 = vmatprep.subr.mxu0 0.0
  %1227 = vmatpush1.msra.mxu0 %v1207
  %1228 = vmatprep.subr.mxu0 0.0
  %1229 = vmatpush1.msra.mxu0 0.0
  %1230 = vmatprep.subr.mxu0 0.0
  %1231 = vmatpush1.msra.mxu0 0.0
  %1232 = vmatprep.subr.mxu0 0.0
  %1233 = vmatpush1.msra.mxu0 0.0
  %1234 = vmatprep.subr.mxu0 0.0
  %1235 = vmatpush1.msra.mxu0 0.0
  %1236 = vmatprep.subr.mxu0 0.0
  %1237 = vmatpush1.msra.mxu0 0.0
  %1238 = vmatprep.subr.mxu0 0.0
  %1239 = vmatpush1.msra.mxu0 0.0
  %1240 = vmatprep.subr.mxu0 0.0
  %1241 = vmatpush1.msra.mxu0 0.0
  %1242 = vmatprep.subr.mxu0 0.0
  %1243 = vmatpush1.msra.mxu0 0.0
  %1244 = vmatprep.subr.mxu0 0.0
  %1245 = vmatpush1.msra.mxu0 0.0
  %1246 = vmatprep.subr.mxu0 0.0
  %1247 = vmatpush1.msra.mxu0 0.0
  %1248 = vmatprep.subr.mxu0 0.0
  %1249 = vmatpush1.msra.mxu0 0.0
  %1250 = vmatprep.subr.mxu0 0.0
  %1251 = vmatpush1.msra.mxu0 0.0
  %1252 = vmatprep.subr.mxu0 0.0
  %1253 = vmatpush1.msra.mxu0 0.0
  %1254 = vmatprep.subr.mxu0 0.0
  %1255 = vmatpush1.msra.mxu0 0.0
  %1256 = vmatprep.subr.mxu0 0.0
  %1257 = vmatpush1.msra.mxu0 0.0
  %1258 = vmatprep.subr.mxu0 0.0
  %1259 = vmatpush1.msra.mxu0 0.0
  %1260 = vmatprep.subr.mxu0 0.0
  %1261 = vmatpush1.msra.mxu0 0.0
  %1262 = vmatprep.subr.mxu0 0.0
  %1263 = vmatpush1.msra.mxu0 0.0
  %1264 = vmatprep.subr.mxu0 0.0
  %1265 = vmatpush1.msra.mxu0 0.0
  %1266 = vmatprep.subr.mxu0 0.0
  %1267 = vmatpush1.msra.mxu0 0.0
  %1268 = vmatprep.subr.mxu0 0.0
  %1269 = vmatpush1.msra.mxu0 0.0
  %1270 = vmatprep.subr.mxu0 0.0
  %1271 = vmatpush1.msra.mxu0 0.0
  %1272 = vmatprep.subr.mxu0 0.0
  %1273 = vmatpush1.msra.mxu0 0.0
  %1274 = vmatprep.subr.mxu0 0.0
  %1275 = vmatpush1.msra.mxu0 0.0
  %1276 = vmatprep.subr.mxu0 0.0
  %1277 = vmatpush1.msra.mxu0 0.0
  %1278 = vmatprep.subr.mxu0 0.0
  %1279 = vmatpush1.msra.mxu0 0.0
  %1280 = vmatprep.subr.mxu0 0.0
  %1281 = vmatpush1.msra.mxu0 0.0
  %1282 = vmatprep.subr.mxu0 0.0
  %1283 = vmatpush1.msra.mxu0 0.0
  %1284 = vmatprep.mubr.f32.mxu0 0.0
  %1285 = vmatmul.mubr.f32.gmra.mrb[0].mxu0 %v1216
  %v1286 = vpop.f32.mrb[0].mxu0
  %v1287 = vadd.f32 %v1214, %v1286
  %v1288 = vpop.f32.mrb[0].mxu0
  %1289 = vmatprep.mubr.f32.mxu0 0.0
  %1290 = vmatmul.mubr.f32.gmra.mrb[0].mxu0 %v1218
  %v1291 = vpop.f32.mrb[0].mxu0
  %v1292 = vadd.f32 %v1214, %v1291
  %v1293 = vpop.f32.mrb[0].mxu0
  %1294 = vdwg.mxu0
  %1295 = vrot.lane.b32.xlu0 %v14, 48
  %v1296 = vpop.permute.xlu0 %1295
  %1297 = vrot.lane.b32.xlu0 %v15, 48
  %v1298 = vpop.permute.xlu0 %1297
  %v1302 = vsel %vm140, %v1184, 0
  %v1305 = vsel %vm140, %v1189, 0
  %v1308 = vsel %vm140, %v1287, 0
  %v1311 = vsel %vm140, %v1292, 0
  %1313 = vmatprep.subr.mxu0 0.0
  %1314 = vmatpush1.xpose.msra.mxu0 %v1308
  %1315 = vmatprep.subr.mxu0 0.0
  %1316 = vmatpush1.xpose.msra.mxu0 %v1311
  %1317 = vmatprep.subr.mxu0 0.0
  %1318 = vmatpush1.xpose.msra.mxu0 0.0
  %1319 = vmatprep.subr.mxu0 0.0
  %1320 = vmatpush1.xpose.msra.mxu0 0.0
  %1321 = vmatprep.subr.mxu0 0.0
  %1322 = vmatpush1.xpose.msra.mxu0 0.0
  %1323 = vmatprep.subr.mxu0 0.0
  %1324 = vmatpush1.xpose.msra.mxu0 0.0
  %1325 = vmatprep.subr.mxu0 0.0
  %1326 = vmatpush1.xpose.msra.mxu0 0.0
  %1327 = vmatprep.subr.mxu0 0.0
  %1328 = vmatpush1.xpose.msra.mxu0 0.0
  %1329 = vmatprep.subr.mxu0 0.0
  %1330 = vmatpush1.xpose.msra.mxu0 0.0
  %1331 = vmatprep.subr.mxu0 0.0
  %1332 = vmatpush1.xpose.msra.mxu0 0.0
  %1333 = vmatprep.subr.mxu0 0.0
  %1334 = vmatpush1.xpose.msra.mxu0 0.0
  %1335 = vmatprep.subr.mxu0 0.0
  %1336 = vmatpush1.xpose.msra.mxu0 0.0
  %1337 = vmatprep.subr.mxu0 0.0
  %1338 = vmatpush1.xpose.msra.mxu0 0.0
  %1339 = vmatprep.subr.mxu0 0.0
  %1340 = vmatpush1.xpose.msra.mxu0 0.0
  %1341 = vmatprep.subr.mxu0 0.0
  %1342 = vmatpush1.xpose.msra.mxu0 0.0
  %1343 = vmatprep.subr.mxu0 0.0
  %1344 = vmatpush1.xpose.msra.mxu0 0.0
  %1345 = vmatprep.subr.mxu0 0.0
  %1346 = vmatpush1.xpose.msra.mxu0 0.0
  %1347 = vmatprep.subr.mxu0 0.0
  %1348 = vmatpush1.xpose.msra.mxu0 0.0
  %1349 = vmatprep.subr.mxu0 0.0
  %1350 = vmatpush1.xpose.msra.mxu0 0.0
  %1351 = vmatprep.subr.mxu0 0.0
  %1352 = vmatpush1.xpose.msra.mxu0 0.0
  %1353 = vmatprep.subr.mxu0 0.0
  %1354 = vmatpush1.xpose.msra.mxu0 0.0
  %1355 = vmatprep.subr.mxu0 0.0
  %1356 = vmatpush1.xpose.msra.mxu0 0.0
  %1357 = vmatprep.subr.mxu0 0.0
  %1358 = vmatpush1.xpose.msra.mxu0 0.0
  %1359 = vmatprep.subr.mxu0 0.0
  %1360 = vmatpush1.xpose.msra.mxu0 0.0
  %1361 = vmatprep.subr.mxu0 0.0
  %1362 = vmatpush1.xpose.msra.mxu0 0.0
  %1363 = vmatprep.subr.mxu0 0.0
  %1364 = vmatpush1.xpose.msra.mxu0 0.0
  %1365 = vmatprep.subr.mxu0 0.0
  %1366 = vmatpush1.xpose.msra.mxu0 0.0
  %1367 = vmatprep.subr.mxu0 0.0
  %1368 = vmatpush1.xpose.msra.mxu0 0.0
  %1369 = vmatprep.subr.mxu0 0.0
  %1370 = vmatpush1.xpose.msra.mxu0 0.0
  %1371 = vmatprep.subr.mxu0 0.0
  %1372 = vmatpush1.xpose.msra.mxu0 0.0
  %1373 = vmatprep.subr.mxu0 0.0
  %1374 = vmatpush1.xpose.msra.mxu0 0.0
  %1375 = vmatprep.subr.mxu0 0.0
  %1376 = vmatpush1.xpose.msra.mxu0 0.0
  %1377 = vmatprep.mubr.f32.mxu0 0.0
  %1378 = vmatmul.mubr.f32.gmra.mrb[0].mxu0 %v1302
  %v1379 = vpop.f32.mrb[0].mxu0
  %v1380 = vadd.f32 %v1296, %v1379
  %v1381 = vpop.f32.mrb[0].mxu0
  %1382 = vmatprep.mubr.f32.mxu0 0.0
  %1383 = vmatmul.mubr.f32.gmra.mrb[0].mxu0 %v1305
  %v1384 = vpop.f32.mrb[0].mxu0
  %v1385 = vadd.f32 %v1298, %v1384
  %v1386 = vpop.f32.mrb[0].mxu0
  %1387 = vdwg.mxu0
  %1388 = vrot.lane.b32.xlu0 %v1184, 120
  %v1389 = vpop.permute.xlu0 %1388
  %1390 = vrot.lane.b32.xlu0 %v1189, 120
  %v1391 = vpop.permute.xlu0 %1390
  %1392 = vrot.lane.b32.xlu0 %v1287, 120
  %v1393 = vpop.permute.xlu0 %1392
  %1394 = vrot.lane.b32.xlu0 %v1292, 120
  %v1395 = vpop.permute.xlu0 %1394
  %v1396 = vsel %vm140, %v1389, 0
  %v1398 = vsel %vm140, %v1391, 0
  %v1400 = vsel %vm140, %v1393, 0
  %v1402 = vsel %vm140, %v1395, 0
  %1404 = vmatprep.subr.mxu0 0.0
  %1405 = vmatpush1.xpose.msra.mxu0 %v1400
  %1406 = vmatprep.subr.mxu0 0.0
  %1407 = vmatpush1.xpose.msra.mxu0 %v1402
  %1408 = vmatprep.subr.mxu0 0.0
  %1409 = vmatpush1.xpose.msra.mxu0 0.0
  %1410 = vmatprep.subr.mxu0 0.0
  %1411 = vmatpush1.xpose.msra.mxu0 0.0
  %1412 = vmatprep.subr.mxu0 0.0
  %1413 = vmatpush1.xpose.msra.mxu0 0.0
  %1414 = vmatprep.subr.mxu0 0.0
  %1415 = vmatpush1.xpose.msra.mxu0 0.0
  %1416 = vmatprep.subr.mxu0 0.0
  %1417 = vmatpush1.xpose.msra.mxu0 0.0
  %1418 = vmatprep.subr.mxu0 0.0
  %1419 = vmatpush1.xpose.msra.mxu0 0.0
  %1420 = vmatprep.subr.mxu0 0.0
  %1421 = vmatpush1.xpose.msra.mxu0 0.0
  %1422 = vmatprep.subr.mxu0 0.0
  %1423 = vmatpush1.xpose.msra.mxu0 0.0
  %1424 = vmatprep.subr.mxu0 0.0
  %1425 = vmatpush1.xpose.msra.mxu0 0.0
  %1426 = vmatprep.subr.mxu0 0.0
  %1427 = vmatpush1.xpose.msra.mxu0 0.0
  %1428 = vmatprep.subr.mxu0 0.0
  %1429 = vmatpush1.xpose.msra.mxu0 0.0
  %1430 = vmatprep.subr.mxu0 0.0
  %1431 = vmatpush1.xpose.msra.mxu0 0.0
  %1432 = vmatprep.subr.mxu0 0.0
  %1433 = vmatpush1.xpose.msra.mxu0 0.0
  %1434 = vmatprep.subr.mxu0 0.0
  %1435 = vmatpush1.xpose.msra.mxu0 0.0
  %1436 = vmatprep.subr.mxu0 0.0
  %1437 = vmatpush1.xpose.msra.mxu0 0.0
  %1438 = vmatprep.subr.mxu0 0.0
  %1439 = vmatpush1.xpose.msra.mxu0 0.0
  %1440 = vmatprep.subr.mxu0 0.0
  %1441 = vmatpush1.xpose.msra.mxu0 0.0
  %1442 = vmatprep.subr.mxu0 0.0
  %1443 = vmatpush1.xpose.msra.mxu0 0.0
  %1444 = vmatprep.subr.mxu0 0.0
  %1445 = vmatpush1.xpose.msra.mxu0 0.0
  %1446 = vmatprep.subr.mxu0 0.0
  %1447 = vmatpush1.xpose.msra.mxu0 0.0
  %1448 = vmatprep.subr.mxu0 0.0
  %1449 = vmatpush1.xpose.msra.mxu0 0.0
  %1450 = vmatprep.subr.mxu0 0.0
  %1451 = vmatpush1.xpose.msra.mxu0 0.0
  %1452 = vmatprep.subr.mxu0 0.0
  %1453 = vmatpush1.xpose.msra.mxu0 0.0
  %1454 = vmatprep.subr.mxu0 0.0
  %1455 = vmatpush1.xpose.msra.mxu0 0.0
  %1456 = vmatprep.subr.mxu0 0.0
  %1457 = vmatpush1.xpose.msra.mxu0 0.0
  %1458 = vmatprep.subr.mxu0 0.0
  %1459 = vmatpush1.xpose.msra.mxu0 0.0
  %1460 = vmatprep.subr.mxu0 0.0
  %1461 = vmatpush1.xpose.msra.mxu0 0.0
  %1462 = vmatprep.subr.mxu0 0.0
  %1463 = vmatpush1.xpose.msra.mxu0 0.0
  %1464 = vmatprep.subr.mxu0 0.0
  %1465 = vmatpush1.xpose.msra.mxu0 0.0
  %1466 = vmatprep.subr.mxu0 0.0
  %1467 = vmatpush1.xpose.msra.mxu0 0.0
  %1468 = vmatprep.mubr.f32.mxu0 0.0
  %1469 = vmatmul.mubr.f32.gmra.mrb[0].mxu0 %v1396
  %v1470 = vpop.f32.mrb[0].mxu0
  %v1471 = vadd.f32 %v1296, %v1470
  %v1472 = vpop.f32.mrb[0].mxu0
  %1473 = vmatprep.mubr.f32.mxu0 0.0
  %1474 = vmatmul.mubr.f32.gmra.mrb[0].mxu0 %v1398
  %v1475 = vpop.f32.mrb[0].mxu0
  %v1476 = vadd.f32 %v1298, %v1475
  %v1477 = vpop.f32.mrb[0].mxu0
  %1478 = vdwg.mxu0
  %1479 = vrot.lane.b32.xlu0 %v1184, 112
  %v1480 = vpop.permute.xlu0 %1479
  %1481 = vrot.lane.b32.xlu0 %v1189, 112
  %v1482 = vpop.permute.xlu0 %1481
  %1483 = vrot.lane.b32.xlu0 %v1287, 112
  %v1484 = vpop.permute.xlu0 %1483
  %1485 = vrot.lane.b32.xlu0 %v1292, 112
  %v1486 = vpop.permute.xlu0 %1485
  %v1487 = vsel %vm140, %v1480, 0
  %v1489 = vsel %vm140, %v1482, 0
  %v1491 = vsel %vm140, %v1484, 0
  %v1493 = vsel %vm140, %v1486, 0
  %1495 = vmatprep.subr.mxu0 0.0
  %1496 = vmatpush1.xpose.msra.mxu0 %v1491
  %1497 = vmatprep.subr.mxu0 0.0
  %1498 = vmatpush1.xpose.msra.mxu0 %v1493
  %1499 = vmatprep.subr.mxu0 0.0
  %1500 = vmatpush1.xpose.msra.mxu0 0.0
  %1501 = vmatprep.subr.mxu0 0.0
  %1502 = vmatpush1.xpose.msra.mxu0 0.0
  %1503 = vmatprep.subr.mxu0 0.0
  %1504 = vmatpush1.xpose.msra.mxu0 0.0
  %1505 = vmatprep.subr.mxu0 0.0
  %1506 = vmatpush1.xpose.msra.mxu0 0.0
  %1507 = vmatprep.subr.mxu0 0.0
  %1508 = vmatpush1.xpose.msra.mxu0 0.0
  %1509 = vmatprep.subr.mxu0 0.0
  %1510 = vmatpush1.xpose.msra.mxu0 0.0
  %1511 = vmatprep.subr.mxu0 0.0
  %1512 = vmatpush1.xpose.msra.mxu0 0.0
  %1513 = vmatprep.subr.mxu0 0.0
  %1514 = vmatpush1.xpose.msra.mxu0 0.0
  %1515 = vmatprep.subr.mxu0 0.0
  %1516 = vmatpush1.xpose.msra.mxu0 0.0
  %1517 = vmatprep.subr.mxu0 0.0
  %1518 = vmatpush1.xpose.msra.mxu0 0.0
  %1519 = vmatprep.subr.mxu0 0.0
  %1520 = vmatpush1.xpose.msra.mxu0 0.0
  %1521 = vmatprep.subr.mxu0 0.0
  %1522 = vmatpush1.xpose.msra.mxu0 0.0
  %1523 = vmatprep.subr.mxu0 0.0
  %1524 = vmatpush1.xpose.msra.mxu0 0.0
  %1525 = vmatprep.subr.mxu0 0.0
  %1526 = vmatpush1.xpose.msra.mxu0 0.0
  %1527 = vmatprep.subr.mxu0 0.0
  %1528 = vmatpush1.xpose.msra.mxu0 0.0
  %1529 = vmatprep.subr.mxu0 0.0
  %1530 = vmatpush1.xpose.msra.mxu0 0.0
  %1531 = vmatprep.subr.mxu0 0.0
  %1532 = vmatpush1.xpose.msra.mxu0 0.0
  %1533 = vmatprep.subr.mxu0 0.0
  %1534 = vmatpush1.xpose.msra.mxu0 0.0
  %1535 = vmatprep.subr.mxu0 0.0
  %1536 = vmatpush1.xpose.msra.mxu0 0.0
  %1537 = vmatprep.subr.mxu0 0.0
  %1538 = vmatpush1.xpose.msra.mxu0 0.0
  %1539 = vmatprep.subr.mxu0 0.0
  %1540 = vmatpush1.xpose.msra.mxu0 0.0
  %1541 = vmatprep.subr.mxu0 0.0
  %1542 = vmatpush1.xpose.msra.mxu0 0.0
  %1543 = vmatprep.subr.mxu0 0.0
  %1544 = vmatpush1.xpose.msra.mxu0 0.0
  %1545 = vmatprep.subr.mxu0 0.0
  %1546 = vmatpush1.xpose.msra.mxu0 0.0
  %1547 = vmatprep.subr.mxu0 0.0
  %1548 = vmatpush1.xpose.msra.mxu0 0.0
  %1549 = vmatprep.subr.mxu0 0.0
  %1550 = vmatpush1.xpose.msra.mxu0 0.0
  %1551 = vmatprep.subr.mxu0 0.0
  %1552 = vmatpush1.xpose.msra.mxu0 0.0
  %1553 = vmatprep.subr.mxu0 0.0
  %1554 = vmatpush1.xpose.msra.mxu0 0.0
  %1555 = vmatprep.subr.mxu0 0.0
  %1556 = vmatpush1.xpose.msra.mxu0 0.0
  %1557 = vmatprep.subr.mxu0 0.0
  %1558 = vmatpush1.xpose.msra.mxu0 0.0
  %1559 = vmatprep.mubr.f32.mxu0 0.0
  %1560 = vmatmul.mubr.f32.gmra.mrb[0].mxu0 %v1487
  %v1561 = vpop.f32.mrb[0].mxu0
  %v1562 = vadd.f32 %v1296, %v1561
  %v1563 = vpop.f32.mrb[0].mxu0
  %1564 = vmatprep.mubr.f32.mxu0 0.0
  %1565 = vmatmul.mubr.f32.gmra.mrb[0].mxu0 %v1489
  %v1566 = vpop.f32.mrb[0].mxu0
  %v1567 = vadd.f32 %v1298, %v1566
  %v1568 = vpop.f32.mrb[0].mxu0
  %1569 = vdwg.mxu0
  %1570 = vrot.lane.b32.xlu0 %v1184, 104
  %v1571 = vpop.permute.xlu0 %1570
  %1572 = vrot.lane.b32.xlu0 %v1189, 104
  %v1573 = vpop.permute.xlu0 %1572
  %1574 = vrot.lane.b32.xlu0 %v1287, 104
  %v1575 = vpop.permute.xlu0 %1574
  %1576 = vrot.lane.b32.xlu0 %v1292, 104
  %v1577 = vpop.permute.xlu0 %1576
  %v1578 = vsel %vm140, %v1571, 0
  %v1580 = vsel %vm140, %v1573, 0
  %v1582 = vsel %vm140, %v1575, 0
  %v1584 = vsel %vm140, %v1577, 0
  %1586 = vmatprep.subr.mxu0 0.0
  %1587 = vmatpush1.xpose.msra.mxu0 %v1582
  %1588 = vmatprep.subr.mxu0 0.0
  %1589 = vmatpush1.xpose.msra.mxu0 %v1584
  %1590 = vmatprep.subr.mxu0 0.0
  %1591 = vmatpush1.xpose.msra.mxu0 0.0
  %1592 = vmatprep.subr.mxu0 0.0
  %1593 = vmatpush1.xpose.msra.mxu0 0.0
  %1594 = vmatprep.subr.mxu0 0.0
  %1595 = vmatpush1.xpose.msra.mxu0 0.0
  %1596 = vmatprep.subr.mxu0 0.0
  %1597 = vmatpush1.xpose.msra.mxu0 0.0
  %1598 = vmatprep.subr.mxu0 0.0
  %1599 = vmatpush1.xpose.msra.mxu0 0.0
  %1600 = vmatprep.subr.mxu0 0.0
  %1601 = vmatpush1.xpose.msra.mxu0 0.0
  %1602 = vmatprep.subr.mxu0 0.0
  %1603 = vmatpush1.xpose.msra.mxu0 0.0
  %1604 = vmatprep.subr.mxu0 0.0
  %1605 = vmatpush1.xpose.msra.mxu0 0.0
  %1606 = vmatprep.subr.mxu0 0.0
  %1607 = vmatpush1.xpose.msra.mxu0 0.0
  %1608 = vmatprep.subr.mxu0 0.0
  %1609 = vmatpush1.xpose.msra.mxu0 0.0
  %1610 = vmatprep.subr.mxu0 0.0
  %1611 = vmatpush1.xpose.msra.mxu0 0.0
  %1612 = vmatprep.subr.mxu0 0.0
  %1613 = vmatpush1.xpose.msra.mxu0 0.0
  %1614 = vmatprep.subr.mxu0 0.0
  %1615 = vmatpush1.xpose.msra.mxu0 0.0
  %1616 = vmatprep.subr.mxu0 0.0
  %1617 = vmatpush1.xpose.msra.mxu0 0.0
  %1618 = vmatprep.subr.mxu0 0.0
  %1619 = vmatpush1.xpose.msra.mxu0 0.0
  %1620 = vmatprep.subr.mxu0 0.0
  %1621 = vmatpush1.xpose.msra.mxu0 0.0
  %1622 = vmatprep.subr.mxu0 0.0
  %1623 = vmatpush1.xpose.msra.mxu0 0.0
  %1624 = vmatprep.subr.mxu0 0.0
  %1625 = vmatpush1.xpose.msra.mxu0 0.0
  %1626 = vmatprep.subr.mxu0 0.0
  %1627 = vmatpush1.xpose.msra.mxu0 0.0
  %1628 = vmatprep.subr.mxu0 0.0
  %1629 = vmatpush1.xpose.msra.mxu0 0.0
  %1630 = vmatprep.subr.mxu0 0.0
  %1631 = vmatpush1.xpose.msra.mxu0 0.0
  %1632 = vmatprep.subr.mxu0 0.0
  %1633 = vmatpush1.xpose.msra.mxu0 0.0
  %1634 = vmatprep.subr.mxu0 0.0
  %1635 = vmatpush1.xpose.msra.mxu0 0.0
  %1636 = vmatprep.subr.mxu0 0.0
  %1637 = vmatpush1.xpose.msra.mxu0 0.0
  %1638 = vmatprep.subr.mxu0 0.0
  %1639 = vmatpush1.xpose.msra.mxu0 0.0
  %1640 = vmatprep.subr.mxu0 0.0
  %1641 = vmatpush1.xpose.msra.mxu0 0.0
  %1642 = vmatprep.subr.mxu0 0.0
  %1643 = vmatpush1.xpose.msra.mxu0 0.0
  %1644 = vmatprep.subr.mxu0 0.0
  %1645 = vmatpush1.xpose.msra.mxu0 0.0
  %1646 = vmatprep.subr.mxu0 0.0
  %1647 = vmatpush1.xpose.msra.mxu0 0.0
  %1648 = vmatprep.subr.mxu0 0.0
  %1649 = vmatpush1.xpose.msra.mxu0 0.0
  %1650 = vmatprep.mubr.f32.mxu0 0.0
  %1651 = vmatmul.mubr.f32.gmra.mrb[0].mxu0 %v1578
  %v1652 = vpop.f32.mrb[0].mxu0
  %v1653 = vadd.f32 %v1296, %v1652
  %v1654 = vpop.f32.mrb[0].mxu0
  %1655 = vmatprep.mubr.f32.mxu0 0.0
  %1656 = vmatmul.mubr.f32.gmra.mrb[0].mxu0 %v1580
  %v1657 = vpop.f32.mrb[0].mxu0
  %v1658 = vadd.f32 %v1298, %v1657
  %v1659 = vpop.f32.mrb[0].mxu0
  %1660 = vdwg.mxu0
  %v1661 = vsel %vm497, %v1380, -inf
  %1662 = vmax.xlane.f32.xlu0 %v1661
  %v1663 = vpop.xlane.xlu0 %1662
  %v1664 = vsel %vm497, %v1385, -inf
  %1665 = vmax.xlane.f32.xlu0 %v1664
  %v1666 = vpop.xlane.xlu0 %1665
  %v1667 = vsub.f32 %v1380, %v1663
  %v1668 = vsub.f32 %v1385, %v1666
  %v1669 = vmul.f32 %v1667, 1.442695
  %v1670 = vpow.pop %v1669
  %v1671 = vmul.f32 %v1668, 1.442695
  %v1672 = vpow.pop %v1671
  %v1673 = vsel %vm497, %v1670, 0.0
  %1674 = vadd.xlane.f32.xlu0 %v1673
  %v1675 = vpop.xlane.xlu0 %1674
  %v1676 = vsel %vm497, %v1672, 0.0
  %1677 = vadd.xlane.f32.xlu0 %v1676
  %v1678 = vpop.xlane.xlu0 %1677
  %v1679 = vrcp.pop %v1675
  %v1680 = vrcp.pop %v1678
  %v1681 = vmul.f32 %v1670, %v1679
  %v1682 = vmul.f32 %v1672, %v1680
  %v1683 = vsel %vm497, %v1471, -inf
  %1684 = vmax.xlane.f32.xlu0 %v1683
  %v1685 = vpop.xlane.xlu0 %1684
  %v1686 = vsel %vm497, %v1476, -inf
  %1687 = vmax.xlane.f32.xlu0 %v1686
  %v1688 = vpop.xlane.xlu0 %1687
  %v1689 = vsub.f32 %v1471, %v1685
  %v1690 = vsub.f32 %v1476, %v1688
  %v1691 = vmul.f32 %v1689, 1.442695
  %v1692 = vpow.pop %v1691
  %v1693 = vmul.f32 %v1690, 1.442695
  %v1694 = vpow.pop %v1693
  %v1695 = vsel %vm497, %v1692, 0.0
  %1696 = vadd.xlane.f32.xlu0 %v1695
  %v1697 = vpop.xlane.xlu0 %1696
  %v1698 = vsel %vm497, %v1694, 0.0
  %1699 = vadd.xlane.f32.xlu0 %v1698
  %v1700 = vpop.xlane.xlu0 %1699
  %v1701 = vrcp.pop %v1697
  %v1702 = vrcp.pop %v1700
  %v1703 = vmul.f32 %v1692, %v1701
  %v1704 = vmul.f32 %v1694, %v1702
  %v1705 = vsel %vm497, %v1562, -inf
  %1706 = vmax.xlane.f32.xlu0 %v1705
  %v1707 = vpop.xlane.xlu0 %1706
  %v1708 = vsel %vm497, %v1567, -inf
  %1709 = vmax.xlane.f32.xlu0 %v1708
  %v1710 = vpop.xlane.xlu0 %1709
  %v1711 = vsub.f32 %v1562, %v1707
  %v1712 = vsub.f32 %v1567, %v1710
  %v1713 = vmul.f32 %v1711, 1.442695
  %v1714 = vpow.pop %v1713
  %v1715 = vmul.f32 %v1712, 1.442695
  %v1716 = vpow.pop %v1715
  %v1717 = vsel %vm497, %v1714, 0.0
  %1718 = vadd.xlane.f32.xlu0 %v1717
  %v1719 = vpop.xlane.xlu0 %1718
  %v1720 = vsel %vm497, %v1716, 0.0
  %1721 = vadd.xlane.f32.xlu0 %v1720
  %v1722 = vpop.xlane.xlu0 %1721
  %v1723 = vrcp.pop %v1719
  %v1724 = vrcp.pop %v1722
  %v1725 = vmul.f32 %v1714, %v1723
  %v1726 = vmul.f32 %v1716, %v1724
  %v1727 = vsel %vm497, %v1653, -inf
  %1728 = vmax.xlane.f32.xlu0 %v1727
  %v1729 = vpop.xlane.xlu0 %1728
  %v1730 = vsel %vm497, %v1658, -inf
  %1731 = vmax.xlane.f32.xlu0 %v1730
  %v1732 = vpop.xlane.xlu0 %1731
  %v1733 = vsub.f32 %v1653, %v1729
  %v1734 = vsub.f32 %v1658, %v1732
  %v1735 = vmul.f32 %v1733, 1.442695
  %v1736 = vpow.pop %v1735
  %v1737 = vmul.f32 %v1734, 1.442695
  %v1738 = vpow.pop %v1737
  %v1739 = vsel %vm497, %v1736, 0.0
  %1740 = vadd.xlane.f32.xlu0 %v1739
  %v1741 = vpop.xlane.xlu0 %1740
  %v1742 = vsel %vm497, %v1738, 0.0
  %1743 = vadd.xlane.f32.xlu0 %v1742
  %v1744 = vpop.xlane.xlu0 %1743
  %v1745 = vrcp.pop %v1741
  %v1746 = vrcp.pop %v1744
  %v1747 = vmul.f32 %v1736, %v1745
  %v1748 = vmul.f32 %v1738, %v1746
  %1749 = vrot.lane.b32.xlu0 %v1287, 96
  %v1750 = vpop.permute.xlu0 %1749
  %1751 = vrot.lane.b32.xlu0 %v1292, 96
  %v1752 = vpop.permute.xlu0 %1751
  %v1756 = vsel %vm497, %v1681, 0
  %v1759 = vsel %vm497, %v1682, 0
  %1761 = vmatprep.subr.mxu0 0.0
  %1762 = vmatpush1.msra.mxu0 %v1750
  %1763 = vmatprep.subr.mxu0 0.0
  %1764 = vmatpush1.msra.mxu0 %v1752
  %1765 = vmatprep.subr.mxu0 0.0
  %1766 = vmatpush1.msra.mxu0 0.0
  %1767 = vmatprep.subr.mxu0 0.0
  %1768 = vmatpush1.msra.mxu0 0.0
  %1769 = vmatprep.subr.mxu0 0.0
  %1770 = vmatpush1.msra.mxu0 0.0
  %1771 = vmatprep.subr.mxu0 0.0
  %1772 = vmatpush1.msra.mxu0 0.0
  %1773 = vmatprep.subr.mxu0 0.0
  %1774 = vmatpush1.msra.mxu0 0.0
  %1775 = vmatprep.subr.mxu0 0.0
  %1776 = vmatpush1.msra.mxu0 0.0
  %1777 = vmatprep.subr.mxu0 0.0
  %1778 = vmatpush1.msra.mxu0 0.0
  %1779 = vmatprep.subr.mxu0 0.0
  %1780 = vmatpush1.msra.mxu0 0.0
  %1781 = vmatprep.subr.mxu0 0.0
  %1782 = vmatpush1.msra.mxu0 0.0
  %1783 = vmatprep.subr.mxu0 0.0
  %1784 = vmatpush1.msra.mxu0 0.0
  %1785 = vmatprep.subr.mxu0 0.0
  %1786 = vmatpush1.msra.mxu0 0.0
  %1787 = vmatprep.subr.mxu0 0.0
  %1788 = vmatpush1.msra.mxu0 0.0
  %1789 = vmatprep.subr.mxu0 0.0
  %1790 = vmatpush1.msra.mxu0 0.0
  %1791 = vmatprep.subr.mxu0 0.0
  %1792 = vmatpush1.msra.mxu0 0.0
  %1793 = vmatprep.subr.mxu0 0.0
  %1794 = vmatpush1.msra.mxu0 0.0
  %1795 = vmatprep.subr.mxu0 0.0
  %1796 = vmatpush1.msra.mxu0 0.0
  %1797 = vmatprep.subr.mxu0 0.0
  %1798 = vmatpush1.msra.mxu0 0.0
  %1799 = vmatprep.subr.mxu0 0.0
  %1800 = vmatpush1.msra.mxu0 0.0
  %1801 = vmatprep.subr.mxu0 0.0
  %1802 = vmatpush1.msra.mxu0 0.0
  %1803 = vmatprep.subr.mxu0 0.0
  %1804 = vmatpush1.msra.mxu0 0.0
  %1805 = vmatprep.subr.mxu0 0.0
  %1806 = vmatpush1.msra.mxu0 0.0
  %1807 = vmatprep.subr.mxu0 0.0
  %1808 = vmatpush1.msra.mxu0 0.0
  %1809 = vmatprep.subr.mxu0 0.0
  %1810 = vmatpush1.msra.mxu0 0.0
  %1811 = vmatprep.subr.mxu0 0.0
  %1812 = vmatpush1.msra.mxu0 0.0
  %1813 = vmatprep.subr.mxu0 0.0
  %1814 = vmatpush1.msra.mxu0 0.0
  %1815 = vmatprep.subr.mxu0 0.0
  %1816 = vmatpush1.msra.mxu0 0.0
  %1817 = vmatprep.subr.mxu0 0.0
  %1818 = vmatpush1.msra.mxu0 0.0
  %1819 = vmatprep.subr.mxu0 0.0
  %1820 = vmatpush1.msra.mxu0 0.0
  %1821 = vmatprep.subr.mxu0 0.0
  %1822 = vmatpush1.msra.mxu0 0.0
  %1823 = vmatprep.subr.mxu0 0.0
  %1824 = vmatpush1.msra.mxu0 0.0
  %1825 = vmatprep.mubr.f32.mxu0 0.0
  %1826 = vmatmul.mubr.f32.gmra.mrb[0].mxu0 %v1756
  %v1827 = vpop.f32.mrb[0].mxu0
  %v1828 = vadd.f32 0.0, %v1827
  %v1829 = vpop.f32.mrb[0].mxu0
  %1830 = vmatprep.mubr.f32.mxu0 0.0
  %1831 = vmatmul.mubr.f32.gmra.mrb[0].mxu0 %v1759
  %v1832 = vpop.f32.mrb[0].mxu0
  %v1833 = vadd.f32 0.0, %v1832
  %v1834 = vpop.f32.mrb[0].mxu0
  %1835 = vdwg.mxu0
  %1836 = vrot.lane.b32.xlu0 %v1287, 88
  %v1837 = vpop.permute.xlu0 %1836
  %1838 = vrot.lane.b32.xlu0 %v1292, 88
  %v1839 = vpop.permute.xlu0 %1838
  %v1843 = vsel %vm497, %v1703, 0
  %v1846 = vsel %vm497, %v1704, 0
  %1848 = vmatprep.subr.mxu0 0.0
  %1849 = vmatpush1.msra.mxu0 %v1837
  %1850 = vmatprep.subr.mxu0 0.0
  %1851 = vmatpush1.msra.mxu0 %v1839
  %1852 = vmatprep.subr.mxu0 0.0
  %1853 = vmatpush1.msra.mxu0 0.0
  %1854 = vmatprep.subr.mxu0 0.0
  %1855 = vmatpush1.msra.mxu0 0.0
  %1856 = vmatprep.subr.mxu0 0.0
  %1857 = vmatpush1.msra.mxu0 0.0
  %1858 = vmatprep.subr.mxu0 0.0
  %1859 = vmatpush1.msra.mxu0 0.0
  %1860 = vmatprep.subr.mxu0 0.0
  %1861 = vmatpush1.msra.mxu0 0.0
  %1862 = vmatprep.subr.mxu0 0.0
  %1863 = vmatpush1.msra.mxu0 0.0
  %1864 = vmatprep.subr.mxu0 0.0
  %1865 = vmatpush1.msra.mxu0 0.0
  %1866 = vmatprep.subr.mxu0 0.0
  %1867 = vmatpush1.msra.mxu0 0.0
  %1868 = vmatprep.subr.mxu0 0.0
  %1869 = vmatpush1.msra.mxu0 0.0
  %1870 = vmatprep.subr.mxu0 0.0
  %1871 = vmatpush1.msra.mxu0 0.0
  %1872 = vmatprep.subr.mxu0 0.0
  %1873 = vmatpush1.msra.mxu0 0.0
  %1874 = vmatprep.subr.mxu0 0.0
  %1875 = vmatpush1.msra.mxu0 0.0
  %1876 = vmatprep.subr.mxu0 0.0
  %1877 = vmatpush1.msra.mxu0 0.0
  %1878 = vmatprep.subr.mxu0 0.0
  %1879 = vmatpush1.msra.mxu0 0.0
  %1880 = vmatprep.subr.mxu0 0.0
  %1881 = vmatpush1.msra.mxu0 0.0
  %1882 = vmatprep.subr.mxu0 0.0
  %1883 = vmatpush1.msra.mxu0 0.0
  %1884 = vmatprep.subr.mxu0 0.0
  %1885 = vmatpush1.msra.mxu0 0.0
  %1886 = vmatprep.subr.mxu0 0.0
  %1887 = vmatpush1.msra.mxu0 0.0
  %1888 = vmatprep.subr.mxu0 0.0
  %1889 = vmatpush1.msra.mxu0 0.0
  %1890 = vmatprep.subr.mxu0 0.0
  %1891 = vmatpush1.msra.mxu0 0.0
  %1892 = vmatprep.subr.mxu0 0.0
  %1893 = vmatpush1.msra.mxu0 0.0
  %1894 = vmatprep.subr.mxu0 0.0
  %1895 = vmatpush1.msra.mxu0 0.0
  %1896 = vmatprep.subr.mxu0 0.0
  %1897 = vmatpush1.msra.mxu0 0.0
  %1898 = vmatprep.subr.mxu0 0.0
  %1899 = vmatpush1.msra.mxu0 0.0
  %1900 = vmatprep.subr.mxu0 0.0
  %1901 = vmatpush1.msra.mxu0 0.0
  %1902 = vmatprep.subr.mxu0 0.0
  %1903 = vmatpush1.msra.mxu0 0.0
  %1904 = vmatprep.subr.mxu0 0.0
  %1905 = vmatpush1.msra.mxu0 0.0
  %1906 = vmatprep.subr.mxu0 0.0
  %1907 = vmatpush1.msra.mxu0 0.0
  %1908 = vmatprep.subr.mxu0 0.0
  %1909 = vmatpush1.msra.mxu0 0.0
  %1910 = vmatprep.subr.mxu0 0.0
  %1911 = vmatpush1.msra.mxu0 0.0
  %1912 = vmatprep.mubr.f32.mxu0 0.0
  %1913 = vmatmul.mubr.f32.gmra.mrb[0].mxu0 %v1843
  %v1914 = vpop.f32.mrb[0].mxu0
  %v1915 = vadd.f32 0.0, %v1914
  %v1916 = vpop.f32.mrb[0].mxu0
  %1917 = vmatprep.mubr.f32.mxu0 0.0
  %1918 = vmatmul.mubr.f32.gmra.mrb[0].mxu0 %v1846
  %v1919 = vpop.f32.mrb[0].mxu0
  %v1920 = vadd.f32 0.0, %v1919
  %v1921 = vpop.f32.mrb[0].mxu0
  %1922 = vdwg.mxu0
  %1923 = vrot.lane.b32.xlu0 %v1287, 80
  %v1924 = vpop.permute.xlu0 %1923
  %1925 = vrot.lane.b32.xlu0 %v1292, 80
  %v1926 = vpop.permute.xlu0 %1925
  %v1930 = vsel %vm497, %v1725, 0
  %v1933 = vsel %vm497, %v1726, 0
  %1935 = vmatprep.subr.mxu0 0.0
  %1936 = vmatpush1.msra.mxu0 %v1924
  %1937 = vmatprep.subr.mxu0 0.0
  %1938 = vmatpush1.msra.mxu0 %v1926
  %1939 = vmatprep.subr.mxu0 0.0
  %1940 = vmatpush1.msra.mxu0 0.0
  %1941 = vmatprep.subr.mxu0 0.0
  %1942 = vmatpush1.msra.mxu0 0.0
  %1943 = vmatprep.subr.mxu0 0.0
  %1944 = vmatpush1.msra.mxu0 0.0
  %1945 = vmatprep.subr.mxu0 0.0
  %1946 = vmatpush1.msra.mxu0 0.0
  %1947 = vmatprep.subr.mxu0 0.0
  %1948 = vmatpush1.msra.mxu0 0.0
  %1949 = vmatprep.subr.mxu0 0.0
  %1950 = vmatpush1.msra.mxu0 0.0
  %1951 = vmatprep.subr.mxu0 0.0
  %1952 = vmatpush1.msra.mxu0 0.0
  %1953 = vmatprep.subr.mxu0 0.0
  %1954 = vmatpush1.msra.mxu0 0.0
  %1955 = vmatprep.subr.mxu0 0.0
  %1956 = vmatpush1.msra.mxu0 0.0
  %1957 = vmatprep.subr.mxu0 0.0
  %1958 = vmatpush1.msra.mxu0 0.0
  %1959 = vmatprep.subr.mxu0 0.0
  %1960 = vmatpush1.msra.mxu0 0.0
  %1961 = vmatprep.subr.mxu0 0.0
  %1962 = vmatpush1.msra.mxu0 0.0
  %1963 = vmatprep.subr.mxu0 0.0
  %1964 = vmatpush1.msra.mxu0 0.0
  %1965 = vmatprep.subr.mxu0 0.0
  %1966 = vmatpush1.msra.mxu0 0.0
  %1967 = vmatprep.subr.mxu0 0.0
  %1968 = vmatpush1.msra.mxu0 0.0
  %1969 = vmatprep.subr.mxu0 0.0
  %1970 = vmatpush1.msra.mxu0 0.0
  %1971 = vmatprep.subr.mxu0 0.0
  %1972 = vmatpush1.msra.mxu0 0.0
  %1973 = vmatprep.subr.mxu0 0.0
  %1974 = vmatpush1.msra.mxu0 0.0
  %1975 = vmatprep.subr.mxu0 0.0
  %1976 = vmatpush1.msra.mxu0 0.0
  %1977 = vmatprep.subr.mxu0 0.0
  %1978 = vmatpush1.msra.mxu0 0.0
  %1979 = vmatprep.subr.mxu0 0.0
  %1980 = vmatpush1.msra.mxu0 0.0
  %1981 = vmatprep.subr.mxu0 0.0
  %1982 = vmatpush1.msra.mxu0 0.0
  %1983 = vmatprep.subr.mxu0 0.0
  %1984 = vmatpush1.msra.mxu0 0.0
  %1985 = vmatprep.subr.mxu0 0.0
  %1986 = vmatpush1.msra.mxu0 0.0
  %1987 = vmatprep.subr.mxu0 0.0
  %1988 = vmatpush1.msra.mxu0 0.0
  %1989 = vmatprep.subr.mxu0 0.0
  %1990 = vmatpush1.msra.mxu0 0.0
  %1991 = vmatprep.subr.mxu0 0.0
  %1992 = vmatpush1.msra.mxu0 0.0
  %1993 = vmatprep.subr.mxu0 0.0
  %1994 = vmatpush1.msra.mxu0 0.0
  %1995 = vmatprep.subr.mxu0 0.0
  %1996 = vmatpush1.msra.mxu0 0.0
  %1997 = vmatprep.subr.mxu0 0.0
  %1998 = vmatpush1.msra.mxu0 0.0
  %1999 = vmatprep.mubr.f32.mxu0 0.0
  %2000 = vmatmul.mubr.f32.gmra.mrb[0].mxu0 %v1930
  %v2001 = vpop.f32.mrb[0].mxu0
  %v2002 = vadd.f32 0.0, %v2001
  %v2003 = vpop.f32.mrb[0].mxu0
  %2004 = vmatprep.mubr.f32.mxu0 0.0
  %2005 = vmatmul.mubr.f32.gmra.mrb[0].mxu0 %v1933
  %v2006 = vpop.f32.mrb[0].mxu0
  %v2007 = vadd.f32 0.0, %v2006
  %v2008 = vpop.f32.mrb[0].mxu0
  %2009 = vdwg.mxu0
  %2010 = vrot.lane.b32.xlu0 %v1287, 72
  %v2011 = vpop.permute.xlu0 %2010
  %2012 = vrot.lane.b32.xlu0 %v1292, 72
  %v2013 = vpop.permute.xlu0 %2012
  %v2017 = vsel %vm497, %v1747, 0
  %v2020 = vsel %vm497, %v1748, 0
  %2022 = vmatprep.subr.mxu0 0.0
  %2023 = vmatpush1.msra.mxu0 %v2011
  %2024 = vmatprep.subr.mxu0 0.0
  %2025 = vmatpush1.msra.mxu0 %v2013
  %2026 = vmatprep.subr.mxu0 0.0
  %2027 = vmatpush1.msra.mxu0 0.0
  %2028 = vmatprep.subr.mxu0 0.0
  %2029 = vmatpush1.msra.mxu0 0.0
  %2030 = vmatprep.subr.mxu0 0.0
  %2031 = vmatpush1.msra.mxu0 0.0
  %2032 = vmatprep.subr.mxu0 0.0
  %2033 = vmatpush1.msra.mxu0 0.0
  %2034 = vmatprep.subr.mxu0 0.0
  %2035 = vmatpush1.msra.mxu0 0.0
  %2036 = vmatprep.subr.mxu0 0.0
  %2037 = vmatpush1.msra.mxu0 0.0
  %2038 = vmatprep.subr.mxu0 0.0
  %2039 = vmatpush1.msra.mxu0 0.0
  %2040 = vmatprep.subr.mxu0 0.0
  %2041 = vmatpush1.msra.mxu0 0.0
  %2042 = vmatprep.subr.mxu0 0.0
  %2043 = vmatpush1.msra.mxu0 0.0
  %2044 = vmatprep.subr.mxu0 0.0
  %2045 = vmatpush1.msra.mxu0 0.0
  %2046 = vmatprep.subr.mxu0 0.0
  %2047 = vmatpush1.msra.mxu0 0.0
  %2048 = vmatprep.subr.mxu0 0.0
  %2049 = vmatpush1.msra.mxu0 0.0
  %2050 = vmatprep.subr.mxu0 0.0
  %2051 = vmatpush1.msra.mxu0 0.0
  %2052 = vmatprep.subr.mxu0 0.0
  %2053 = vmatpush1.msra.mxu0 0.0
  %2054 = vmatprep.subr.mxu0 0.0
  %2055 = vmatpush1.msra.mxu0 0.0
  %2056 = vmatprep.subr.mxu0 0.0
  %2057 = vmatpush1.msra.mxu0 0.0
  %2058 = vmatprep.subr.mxu0 0.0
  %2059 = vmatpush1.msra.mxu0 0.0
  %2060 = vmatprep.subr.mxu0 0.0
  %2061 = vmatpush1.msra.mxu0 0.0
  %2062 = vmatprep.subr.mxu0 0.0
  %2063 = vmatpush1.msra.mxu0 0.0
  %2064 = vmatprep.subr.mxu0 0.0
  %2065 = vmatpush1.msra.mxu0 0.0
  %2066 = vmatprep.subr.mxu0 0.0
  %2067 = vmatpush1.msra.mxu0 0.0
  %2068 = vmatprep.subr.mxu0 0.0
  %2069 = vmatpush1.msra.mxu0 0.0
  %2070 = vmatprep.subr.mxu0 0.0
  %2071 = vmatpush1.msra.mxu0 0.0
  %2072 = vmatprep.subr.mxu0 0.0
  %2073 = vmatpush1.msra.mxu0 0.0
  %2074 = vmatprep.subr.mxu0 0.0
  %2075 = vmatpush1.msra.mxu0 0.0
  %2076 = vmatprep.subr.mxu0 0.0
  %2077 = vmatpush1.msra.mxu0 0.0
  %2078 = vmatprep.subr.mxu0 0.0
  %2079 = vmatpush1.msra.mxu0 0.0
  %2080 = vmatprep.subr.mxu0 0.0
  %2081 = vmatpush1.msra.mxu0 0.0
  %2082 = vmatprep.subr.mxu0 0.0
  %2083 = vmatpush1.msra.mxu0 0.0
  %2084 = vmatprep.subr.mxu0 0.0
  %2085 = vmatpush1.msra.mxu0 0.0
  %2086 = vmatprep.mubr.f32.mxu0 0.0
  %2087 = vmatmul.mubr.f32.gmra.mrb[0].mxu0 %v2017
  %v2088 = vpop.f32.mrb[0].mxu0
  %v2089 = vadd.f32 0.0, %v2088
  %v2090 = vpop.f32.mrb[0].mxu0
  %2091 = vmatprep.mubr.f32.mxu0 0.0
  %2092 = vmatmul.mubr.f32.gmra.mrb[0].mxu0 %v2020
  %v2093 = vpop.f32.mrb[0].mxu0
  %v2094 = vadd.f32 0.0, %v2093
  %v2095 = vpop.f32.mrb[0].mxu0
  %2096 = vdwg.mxu0
  %2099 = vrot.lane.b32.xlu0 %v1915, 8
  %v2100 = vpop.permute.xlu0 %2099
  %2101 = vrot.lane.b32.xlu0 %v1920, 8
  %v2102 = vpop.permute.xlu0 %2101
  %2107 = vrot.lane.b32.xlu0 %v2002, 16
  %v2108 = vpop.permute.xlu0 %2107
  %2109 = vrot.lane.b32.xlu0 %v2007, 16
  %v2110 = vpop.permute.xlu0 %2109
  %2115 = vrot.lane.b32.xlu0 %v2089, 24
  %v2116 = vpop.permute.xlu0 %2115
  %2117 = vrot.lane.b32.xlu0 %v2094, 24
  %v2118 = vpop.permute.xlu0 %2117
  %v2121 = vsel %vm140, %v1828, %v2100
  %v2122 = vsel %vm140, %v1833, %v2102
  %v2123 = vsel %vm497, %v2121, %v2108
  %v2124 = vsel %vm497, %v2122, %v2110
  %v2125 = vsel %vm962, %v2123, %v2116
  %v2126 = vsel %vm962, %v2124, %v2118
  %2127 = vrot.lane.b32.xlu0 %v20, 32
  %v2128 = vpop.permute.xlu0 %2127
  %2129 = vrot.lane.b32.xlu0 %v21, 32
  %v2130 = vpop.permute.xlu0 %2129
  %2131 = vrot.lane.b32.xlu0 %v22, 32
  %v2132 = vpop.permute.xlu0 %2131
  %2133 = vrot.lane.b32.xlu0 %v23, 32
  %v2134 = vpop.permute.xlu0 %2133
  %2140 = vrot.lane.b32.xlu0 %v968, 96
  %v2141 = vpop.permute.xlu0 %2140
  %v2144 = vsel %vm46, %v2125, 0
  %v2147 = vsel %vm46, %v2126, 0
  %2149 = vmatprep.subr.mxu0 0.0
  %2150 = vmatpush1.msra.mxu0 %v2128
  %2151 = vmatprep.subr.mxu0 0.0
  %2152 = vmatpush1.msra.mxu0 %v2130
  %2153 = vmatprep.subr.mxu0 0.0
  %2154 = vmatpush1.msra.mxu0 %v2132
  %2155 = vmatprep.subr.mxu0 0.0
  %2156 = vmatpush1.msra.mxu0 %v2134
  %2157 = vmatprep.subr.mxu0 0.0
  %2158 = vmatpush1.msra.mxu0 0.0
  %2159 = vmatprep.subr.mxu0 0.0
  %2160 = vmatpush1.msra.mxu0 0.0
  %2161 = vmatprep.subr.mxu0 0.0
  %2162 = vmatpush1.msra.mxu0 0.0
  %2163 = vmatprep.subr.mxu0 0.0
  %2164 = vmatpush1.msra.mxu0 0.0
  %2165 = vmatprep.subr.mxu0 0.0
  %2166 = vmatpush1.msra.mxu0 0.0
  %2167 = vmatprep.subr.mxu0 0.0
  %2168 = vmatpush1.msra.mxu0 0.0
  %2169 = vmatprep.subr.mxu0 0.0
  %2170 = vmatpush1.msra.mxu0 0.0
  %2171 = vmatprep.subr.mxu0 0.0
  %2172 = vmatpush1.msra.mxu0 0.0
  %2173 = vmatprep.subr.mxu0 0.0
  %2174 = vmatpush1.msra.mxu0 0.0
  %2175 = vmatprep.subr.mxu0 0.0
  %2176 = vmatpush1.msra.mxu0 0.0
  %2177 = vmatprep.subr.mxu0 0.0
  %2178 = vmatpush1.msra.mxu0 0.0
  %2179 = vmatprep.subr.mxu0 0.0
  %2180 = vmatpush1.msra.mxu0 0.0
  %2181 = vmatprep.subr.mxu0 0.0
  %2182 = vmatpush1.msra.mxu0 0.0
  %2183 = vmatprep.subr.mxu0 0.0
  %2184 = vmatpush1.msra.mxu0 0.0
  %2185 = vmatprep.subr.mxu0 0.0
  %2186 = vmatpush1.msra.mxu0 0.0
  %2187 = vmatprep.subr.mxu0 0.0
  %2188 = vmatpush1.msra.mxu0 0.0
  %2189 = vmatprep.subr.mxu0 0.0
  %2190 = vmatpush1.msra.mxu0 0.0
  %2191 = vmatprep.subr.mxu0 0.0
  %2192 = vmatpush1.msra.mxu0 0.0
  %2193 = vmatprep.subr.mxu0 0.0
  %2194 = vmatpush1.msra.mxu0 0.0
  %2195 = vmatprep.subr.mxu0 0.0
  %2196 = vmatpush1.msra.mxu0 0.0
  %2197 = vmatprep.subr.mxu0 0.0
  %2198 = vmatpush1.msra.mxu0 0.0
  %2199 = vmatprep.subr.mxu0 0.0
  %2200 = vmatpush1.msra.mxu0 0.0
  %2201 = vmatprep.subr.mxu0 0.0
  %2202 = vmatpush1.msra.mxu0 0.0
  %2203 = vmatprep.subr.mxu0 0.0
  %2204 = vmatpush1.msra.mxu0 0.0
  %2205 = vmatprep.subr.mxu0 0.0
  %2206 = vmatpush1.msra.mxu0 0.0
  %2207 = vmatprep.subr.mxu0 0.0
  %2208 = vmatpush1.msra.mxu0 0.0
  %2209 = vmatprep.subr.mxu0 0.0
  %2210 = vmatpush1.msra.mxu0 0.0
  %2211 = vmatprep.subr.mxu0 0.0
  %2212 = vmatpush1.msra.mxu0 0.0
  %2213 = vmatprep.mubr.f32.mxu0 0.0
  %2214 = vmatmul.mubr.f32.gmra.mrb[0].mxu0 %v2144
  %v2215 = vpop.f32.mrb[0].mxu0
  %v2216 = vadd.f32 %v2141, %v2215
  %v2217 = vpop.f32.mrb[0].mxu0
  %2218 = vmatprep.mubr.f32.mxu0 0.0
  %2219 = vmatmul.mubr.f32.gmra.mrb[0].mxu0 %v2147
  %v2220 = vpop.f32.mrb[0].mxu0
  %v2221 = vadd.f32 %v2141, %v2220
  %v2222 = vpop.f32.mrb[0].mxu0
  %2223 = vdwg.mxu0
  %2224 = vrot.lane.b32.xlu0 %v1681, 120
  %v2225 = vpop.permute.xlu0 %2224
  %2226 = vrot.lane.b32.xlu0 %v1682, 120
  %v2227 = vpop.permute.xlu0 %2226
  %v2230 = vadd.f32 %v1681, %v2225
  %v2231 = vadd.f32 %v1682, %v2227
  %2232 = vrot.lane.b32.xlu0 %v1703, 120
  %v2233 = vpop.permute.xlu0 %2232
  %2234 = vrot.lane.b32.xlu0 %v1704, 120
  %v2235 = vpop.permute.xlu0 %2234
  %v2238 = vadd.f32 %v1703, %v2233
  %v2239 = vadd.f32 %v1704, %v2235
  %2240 = vrot.lane.b32.xlu0 %v1725, 120
  %v2241 = vpop.permute.xlu0 %2240
  %2242 = vrot.lane.b32.xlu0 %v1726, 120
  %v2243 = vpop.permute.xlu0 %2242
  %v2246 = vadd.f32 %v1725, %v2241
  %v2247 = vadd.f32 %v1726, %v2243
  %2248 = vrot.lane.b32.xlu0 %v1747, 120
  %v2249 = vpop.permute.xlu0 %2248
  %2250 = vrot.lane.b32.xlu0 %v1748, 120
  %v2251 = vpop.permute.xlu0 %2250
  %v2254 = vadd.f32 %v1747, %v2249
  %v2255 = vadd.f32 %v1748, %v2251
  %2258 = vrot.lane.b32.xlu0 %v2238, 8
  %v2259 = vpop.permute.xlu0 %2258
  %2260 = vrot.lane.b32.xlu0 %v2239, 8
  %v2261 = vpop.permute.xlu0 %2260
  %2266 = vrot.lane.b32.xlu0 %v2246, 16
  %v2267 = vpop.permute.xlu0 %2266
  %2268 = vrot.lane.b32.xlu0 %v2247, 16
  %v2269 = vpop.permute.xlu0 %2268
  %2274 = vrot.lane.b32.xlu0 %v2254, 24
  %v2275 = vpop.permute.xlu0 %2274
  %2276 = vrot.lane.b32.xlu0 %v2255, 24
  %v2277 = vpop.permute.xlu0 %2276
  %v2280 = vsel %vm140, %v2230, %v2259
  %v2281 = vsel %vm140, %v2231, %v2261
  %v2282 = vsel %vm497, %v2280, %v2267
  %v2283 = vsel %vm497, %v2281, %v2269
  %v2284 = vsel %vm962, %v2282, %v2275
  %v2285 = vsel %vm962, %v2283, %v2277
  %2288 = vrot.lane.b32.xlu0 %v2284, 32
  %v2289 = vpop.permute.xlu0 %2288
  %2290 = vrot.lane.b32.xlu0 %v2285, 32
  %v2291 = vpop.permute.xlu0 %2290
  %vm2294 = vcmask 523520
  %2295 = vst.msk [vmem:[%s3] sm:$0xff] %vm2294, %v2289
  %2296 = vst.msk [vmem:[%s3 + $0x8] sm:$0xff] %vm2294, %v2291
  %v2297 = vadd.f32 %v1105, %v2216
  %v2298 = vadd.f32 %v1106, %v2221
  %v2299 = vsel %vm46, %v2297, 0.0
  %2300 = vadd.xlane.f32.xlu0 %v2299
  %v2301 = vpop.xlane.xlu0 %2300
  %v2302 = vsel %vm46, %v2298, 0.0
  %2303 = vadd.xlane.f32.xlu0 %v2302
  %v2304 = vpop.xlane.xlu0 %2303
  %v2305 = vmul.f32 %v2301, %v1074
  %v2306 = vmul.f32 %v2304, %v1074
  %v2307 = vsub.f32 %v2297, %v2305
  %v2308 = vsub.f32 %v2298, %v2306
  %v2309 = vmul.f32 %v2307, %v2307
  %v2310 = vmul.f32 %v2308, %v2308
  %v2311 = vsel %vm46, %v2309, 0.0
  %2312 = vadd.xlane.f32.xlu0 %v2311
  %v2313 = vpop.xlane.xlu0 %2312
  %v2314 = vsel %vm46, %v2310, 0.0
  %2315 = vadd.xlane.f32.xlu0 %v2314
  %v2316 = vpop.xlane.xlu0 %2315
  %v2317 = vmul.f32 %v2313, %v1074
  %v2318 = vmul.f32 %v2316, %v1074
  %v2319 = vadd.f32 %v2317, 1e-05
  %v2320 = vadd.f32 %v2318, 1e-05
  %v2321 = vrsqrt.pop %v2319
  %v2322 = vrsqrt.pop %v2320
  %v2323 = vmul.f32 %v2307, %v2321
  %v2324 = vmul.f32 %v2308, %v2322
  %2325 = vrot.lane.b32.xlu0 %v1098, 64
  %v2326 = vpop.permute.xlu0 %2325
  %v2328 = vmul.f32 %v2323, %v2326
  %v2329 = vmul.f32 %v2324, %v2326
  %v2330 = vlaneseq
  %v2331 = vshrl.u32 %v2330, 7
  %v2332 = vsub.s32 0, %v2331
  %v2333 = vrot.slane %v32, %v2332
  %v2334 = vadd.f32 %v2328, %v2333
  %v2335 = vadd.f32 %v2329, %v2333
  %v2336 = vlaneseq
  %v2337 = vshrl.u32 %v2336, 7
  %v2338 = vsub.s32 0, %v2337
  %v2339 = vrot.slane %v33, %v2338
  %v2341 = vsel %vm46, %v2334, 0
  %v2344 = vsel %vm46, %v2335, 0
  %2346 = vmatprep.subr.mxu0 0.0
  %2347 = vmatpush1.msra.mxu0 %v24
  %2348 = vmatprep.subr.mxu0 0.0
  %2349 = vmatpush1.msra.mxu0 %v25
  %2350 = vmatprep.subr.mxu0 0.0
  %2351 = vmatpush1.msra.mxu0 %v26
  %2352 = vmatprep.subr.mxu0 0.0
  %2353 = vmatpush1.msra.mxu0 %v27
  %2354 = vmatprep.subr.mxu0 0.0
  %2355 = vmatpush1.msra.mxu0 0.0
  %2356 = vmatprep.subr.mxu0 0.0
  %2357 = vmatpush1.msra.mxu0 0.0
  %2358 = vmatprep.subr.mxu0 0.0
  %2359 = vmatpush1.msra.mxu0 0.0
  %2360 = vmatprep.subr.mxu0 0.0
  %2361 = vmatpush1.msra.mxu0 0.0
  %2362 = vmatprep.subr.mxu0 0.0
  %2363 = vmatpush1.msra.mxu0 0.0
  %2364 = vmatprep.subr.mxu0 0.0
  %2365 = vmatpush1.msra.mxu0 0.0
  %2366 = vmatprep.subr.mxu0 0.0
  %2367 = vmatpush1.msra.mxu0 0.0
  %2368 = vmatprep.subr.mxu0 0.0
  %2369 = vmatpush1.msra.mxu0 0.0
  %2370 = vmatprep.subr.mxu0 0.0
  %2371 = vmatpush1.msra.mxu0 0.0
  %2372 = vmatprep.subr.mxu0 0.0
  %2373 = vmatpush1.msra.mxu0 0.0
  %2374 = vmatprep.subr.mxu0 0.0
  %2375 = vmatpush1.msra.mxu0 0.0
  %2376 = vmatprep.subr.mxu0 0.0
  %2377 = vmatpush1.msra.mxu0 0.0
  %2378 = vmatprep.subr.mxu0 0.0
  %2379 = vmatpush1.msra.mxu0 0.0
  %2380 = vmatprep.subr.mxu0 0.0
  %2381 = vmatpush1.msra.mxu0 0.0
  %2382 = vmatprep.subr.mxu0 0.0
  %2383 = vmatpush1.msra.mxu0 0.0
  %2384 = vmatprep.subr.mxu0 0.0
  %2385 = vmatpush1.msra.mxu0 0.0
  %2386 = vmatprep.subr.mxu0 0.0
  %2387 = vmatpush1.msra.mxu0 0.0
  %2388 = vmatprep.subr.mxu0 0.0
  %2389 = vmatpush1.msra.mxu0 0.0
  %2390 = vmatprep.subr.mxu0 0.0
  %2391 = vmatpush1.msra.mxu0 0.0
  %2392 = vmatprep.subr.mxu0 0.0
  %2393 = vmatpush1.msra.mxu0 0.0
  %2394 = vmatprep.subr.mxu0 0.0
  %2395 = vmatpush1.msra.mxu0 0.0
  %2396 = vmatprep.subr.mxu0 0.0
  %2397 = vmatpush1.msra.mxu0 0.0
  %2398 = vmatprep.subr.mxu0 0.0
  %2399 = vmatpush1.msra.mxu0 0.0
  %2400 = vmatprep.subr.mxu0 0.0
  %2401 = vmatpush1.msra.mxu0 0.0
  %2402 = vmatprep.subr.mxu0 0.0
  %2403 = vmatpush1.msra.mxu0 0.0
  %2404 = vmatprep.subr.mxu0 0.0
  %2405 = vmatpush1.msra.mxu0 0.0
  %2406 = vmatprep.subr.mxu0 0.0
  %2407 = vmatpush1.msra.mxu0 0.0
  %2408 = vmatprep.subr.mxu0 0.0
  %2409 = vmatpush1.msra.mxu0 0.0
  %2410 = vmatprep.mubr.f32.mxu0 0.0
  %2411 = vmatmul.mubr.f32.gmra.mrb[0].mxu0 %v2341
  %v2412 = vpop.f32.mrb[0].mxu0
  %v2413 = vadd.f32 %v2339, %v2412
  %v2414 = vpop.f32.mrb[0].mxu0
  %2415 = vmatprep.mubr.f32.mxu0 0.0
  %2416 = vmatmul.mubr.f32.gmra.mrb[0].mxu0 %v2344
  %v2417 = vpop.f32.mrb[0].mxu0
  %v2418 = vadd.f32 %v2339, %v2417
  %v2419 = vpop.f32.mrb[0].mxu0
  %2420 = vdwg.mxu0
  %v2421 = vmax.f32 %v2413, 0.0
  %v2422 = vmax.f32 %v2418, 0.0
  %2423 = vrot.lane.b32.xlu0 %v968, 64
  %v2424 = vpop.permute.xlu0 %2423
  %vm2426 = vcmask 523264
  %v2428 = vsel %vm2426, %v2421, 0
  %v2431 = vsel %vm2426, %v2422, 0
  %2433 = vmatprep.subr.mxu0 0.0
  %2434 = vmatpush1.msra.mxu0 %v34
  %2435 = vmatprep.subr.mxu0 0.0
  %2436 = vmatpush1.msra.mxu0 %v35
  %2437 = vmatprep.subr.mxu0 0.0
  %2438 = vmatpush1.msra.mxu0 %v36
  %2439 = vmatprep.subr.mxu0 0.0
  %2440 = vmatpush1.msra.mxu0 %v37
  %2441 = vmatprep.subr.mxu0 0.0
  %2442 = vmatpush1.msra.mxu0 %v38
  %2443 = vmatprep.subr.mxu0 0.0
  %2444 = vmatpush1.msra.mxu0 %v39
  %2445 = vmatprep.subr.mxu0 0.0
  %2446 = vmatpush1.msra.mxu0 %v40
  %2447 = vmatprep.subr.mxu0 0.0
  %2448 = vmatpush1.msra.mxu0 %v41
  %2449 = vmatprep.subr.mxu0 0.0
  %2450 = vmatpush1.msra.mxu0 0.0
  %2451 = vmatprep.subr.mxu0 0.0
  %2452 = vmatpush1.msra.mxu0 0.0
  %2453 = vmatprep.subr.mxu0 0.0
  %2454 = vmatpush1.msra.mxu0 0.0
  %2455 = vmatprep.subr.mxu0 0.0
  %2456 = vmatpush1.msra.mxu0 0.0
  %2457 = vmatprep.subr.mxu0 0.0
  %2458 = vmatpush1.msra.mxu0 0.0
  %2459 = vmatprep.subr.mxu0 0.0
  %2460 = vmatpush1.msra.mxu0 0.0
  %2461 = vmatprep.subr.mxu0 0.0
  %2462 = vmatpush1.msra.mxu0 0.0
  %2463 = vmatprep.subr.mxu0 0.0
  %2464 = vmatpush1.msra.mxu0 0.0
  %2465 = vmatprep.subr.mxu0 0.0
  %2466 = vmatpush1.msra.mxu0 0.0
  %2467 = vmatprep.subr.mxu0 0.0
  %2468 = vmatpush1.msra.mxu0 0.0
  %2469 = vmatprep.subr.mxu0 0.0
  %2470 = vmatpush1.msra.mxu0 0.0
  %2471 = vmatprep.subr.mxu0 0.0
  %2472 = vmatpush1.msra.mxu0 0.0
  %2473 = vmatprep.subr.mxu0 0.0
  %2474 = vmatpush1.msra.mxu0 0.0
  %2475 = vmatprep.subr.mxu0 0.0
  %2476 = vmatpush1.msra.mxu0 0.0
  %2477 = vmatprep.subr.mxu0 0.0
  %2478 = vmatpush1.msra.mxu0 0.0
  %2479 = vmatprep.subr.mxu0 0.0
  %2480 = vmatpush1.msra.mxu0 0.0
  %2481 = vmatprep.subr.mxu0 0.0
  %2482 = vmatpush1.msra.mxu0 0.0
  %2483 = vmatprep.subr.mxu0 0.0
  %2484 = vmatpush1.msra.mxu0 0.0
  %2485 = vmatprep.subr.mxu0 0.0
  %2486 = vmatpush1.msra.mxu0 0.0
  %2487 = vmatprep.subr.mxu0 0.0
  %2488 = vmatpush1.msra.mxu0 0.0
  %2489 = vmatprep.subr.mxu0 0.0
  %2490 = vmatpush1.msra.mxu0 0.0
  %2491 = vmatprep.subr.mxu0 0.0
  %2492 = vmatpush1.msra.mxu0 0.0
  %2493 = vmatprep.subr.mxu0 0.0
  %2494 = vmatpush1.msra.mxu0 0.0
  %2495 = vmatprep.subr.mxu0 0.0
  %2496 = vmatpush1.msra.mxu0 0.0
  %2497 = vmatprep.mubr.f32.mxu0 0.0
  %2498 = vmatmul.mubr.f32.gmra.mrb[0].mxu0 %v2428
  %v2499 = vpop.f32.mrb[0].mxu0
  %v2500 = vadd.f32 %v2424, %v2499
  %v2501 = vpop.f32.mrb[0].mxu0
  %2502 = vmatprep.mubr.f32.mxu0 0.0
  %2503 = vmatmul.mubr.f32.gmra.mrb[0].mxu0 %v2431
  %v2504 = vpop.f32.mrb[0].mxu0
  %v2505 = vadd.f32 %v2424, %v2504
  %v2506 = vpop.f32.mrb[0].mxu0
  %2507 = vdwg.mxu0
  %v2508 = vadd.f32 %v2334, %v2500
  %v2509 = vadd.f32 %v2335, %v2505
  %v2510 = vsel %vm46, %v2508, 0.0
  %2511 = vadd.xlane.f32.xlu0 %v2510
  %v2512 = vpop.xlane.xlu0 %2511
  %v2513 = vsel %vm46, %v2509, 0.0
  %2514 = vadd.xlane.f32.xlu0 %v2513
  %v2515 = vpop.xlane.xlu0 %2514
  %v2516 = vmul.f32 %v2512, %v1074
  %v2517 = vmul.f32 %v2515, %v1074
  %v2518 = vsub.f32 %v2508, %v2516
  %v2519 = vsub.f32 %v2509, %v2517
  %v2520 = vmul.f32 %v2518, %v2518
  %v2521 = vmul.f32 %v2519, %v2519
  %v2522 = vsel %vm46, %v2520, 0.0
  %2523 = vadd.xlane.f32.xlu0 %v2522
  %v2524 = vpop.xlane.xlu0 %2523
  %v2525 = vsel %vm46, %v2521, 0.0
  %2526 = vadd.xlane.f32.xlu0 %v2525
  %v2527 = vpop.xlane.xlu0 %2526
  %v2528 = vmul.f32 %v2524, %v1074
  %v2529 = vmul.f32 %v2527, %v1074
  %v2530 = vadd.f32 %v2528, 1e-05
  %v2531 = vadd.f32 %v2529, 1e-05
  %v2532 = vrsqrt.pop %v2530
  %v2533 = vrsqrt.pop %v2531
  %v2534 = vmul.f32 %v2518, %v2532
  %v2535 = vmul.f32 %v2519, %v2533
  %2537 = vrot.lane.b32.xlu0 %v2333, 96
  %v2538 = vpop.permute.xlu0 %2537
  %v2540 = vmul.f32 %v2534, %v2538
  %v2541 = vmul.f32 %v2535, %v2538
  %2542 = vrot.lane.b32.xlu0 %v2333, 64
  %v2543 = vpop.permute.xlu0 %2542
  %v2545 = vadd.f32 %v2540, %v2543
  %v2546 = vadd.f32 %v2541, %v2543
  %2547 = vst.msk [vmem:[%s3] sm:$0xff] %vm46, %v2545
  %2548 = vst.msk [vmem:[%s3 + $0x8] sm:$0xff] %vm46, %v2546
  // Predicated region
  $region14: #{decoder_layer.1} parent=0 // pred_check
    _
  $region15: #{decoder_layer.1} parent=0 // pred_check_branch
    %2550 = sbr.rel (0) target = $region17
  $region16: #{decoder_layer.1} parent=0 // pred_region
    _
  $region17: #{decoder_layer.1} parent=0 // pred_fallthru
    _
  // Predicated region
  $region18: #{decoder_layer.1} parent=0 // pred_check
    _
  $region19: #{decoder_layer.1} parent=0 // pred_check_branch
    %2552 = sbr.rel (0) target = $region21
  $region20: #{decoder_layer.1} parent=0 // pred_region
    _
  $region21: #{decoder_layer.1} parent=0 // pred_fallthru
    _

</llo_original>
